<compile_context>
chip_gen: v5e
topology: v5e:2x2
jax: 0.10.0
libtpu: 0.0.40
codegen_flags: <defaults>
</compile_context>

<pallas_src>
import functools

import jax
import jax.numpy as jnp
from jax.experimental import pallas as pl
from jax.experimental.pallas import tpu as pltpu

LANE = 128
NODE_ALIGN = 256     # fills the 256x256 MXU on v6e/v7x; two clean passes on v5e's 128x128


def _round_up(v, m):
    return ((v + m - 1) // m) * m


def _gcn_kernel(a_ref, x_ref, w_ref, scale_ref, shift_ref, o_ref, y_ref, h_ref,
                *, num_layers, hidden, tm):
    f32 = jnp.float32
    bf16 = jnp.bfloat16
    l = pl.program_id(0)          # layer index            (carried activation -> arbitrary)
    r = pl.program_id(1)          # destination-row tile   (y carry -> arbitrary)

    # ---- once per layer (first row tile): h = activation @ W_l, kept resident in VMEM ----
    @pl.when(r == 0)
    def _():
        @pl.when(l == 0)
        def _():
            h_ref[...] = jnp.dot(x_ref[...], w_ref[0],
                                 preferred_element_type=f32).astype(bf16)

        @pl.when(l != 0)
        def _():
            h_ref[...] = jnp.dot(y_ref[...], w_ref[0],
                                 preferred_element_type=f32).astype(bf16)

    # ---- per destination-row tile: rows = A_l[tile] @ h (contracts over ALL source rows) ----
    a_tile = a_ref[0].astype(f32).astype(bf16)    # int8 HBM storage -> bf16 for the MXU (exact)
    rows = jnp.dot(a_tile, h_ref[...], preferred_element_type=f32)        # [tm, h_pad] f32

    @pl.when(l != num_layers - 1)
    def _():
        # folded BatchNorm (scale/shift) + ReLU
        # TODO(synk): dropout(p=0.5) is identity in eval mode; training-mode RNG dropout omitted.
        act = jnp.maximum(rows * scale_ref[0] + shift_ref[0], 0.0)
        row0 = pl.multiple_of(r * tm, tm)
        y_ref[pl.ds(row0, tm), :] = act.astype(y_ref.dtype)

    @pl.when(l == num_layers - 1)
    def _():
        # masked log_softmax over the real `hidden` channels (lane padding excluded)
        col = jax.lax.broadcasted_iota(jnp.int32, rows.shape, 1)
        valid = col < hidden
        ym = jnp.where(valid, rows, -1e30)
        m = jnp.max(ym, axis=-1, keepdims=True)
        s = ym - m
        lse = jnp.log(jnp.sum(jnp.exp(s), axis=-1, keepdims=True))
        o_ref[...] = jnp.where(valid, s - lse, 0.0).astype(o_ref.dtype)


def _prepare_inputs(x, adjs, weights, bn_params, num_layers, hidden, eps=1e-5):
    """Host-side padding, BN folding, weight stacking and dtype prep for the fused kernel."""
    n, c_in = x.shape
    n_pad = max(_round_up(n, NODE_ALIGN), NODE_ALIGN)
    h_pad = max(_round_up(max(hidden, c_in), LANE), LANE)

    # input features padded into the activation slab [n_pad, h_pad] (extra cols are zero)
    x_p = (jnp.zeros((n_pad, h_pad), jnp.float32)
           .at[:n, :c_in].set(x.astype(jnp.float32))
           .astype(jnp.bfloat16))

    # adjacency stacked per layer, stored int8 (edge multiplicities are small integers; <=127 exact)
    a_stack = jnp.zeros((num_layers, n_pad, n_pad), jnp.int8)
    for i, a in enumerate(adjs):
        a_stack = a_stack.at[i, :n, :n].set(jnp.round(a).astype(jnp.int8))

    # weights stacked; W0 lives in [:c_in, :hidden], the rest in [:hidden, :hidden]
    w_stack = jnp.zeros((num_layers, h_pad, h_pad), jnp.float32)
    w_stack = w_stack.at[0, :c_in, :hidden].set(weights[0])
    for i in range(1, num_layers):
        w_stack = w_stack.at[i, :hidden, :hidden].set(weights[i])
    w_stack = w_stack.astype(jnp.bfloat16)

    # folded BatchNorm (eval mode): y*scale + shift; last layer has no BN (stays 0, never applied)
    scale = jnp.zeros((num_layers, 1, h_pad), jnp.float32)
    shift = jnp.zeros((num_layers, 1, h_pad), jnp.float32)
    for i in range(num_layers - 1):
        bn = bn_params[i]
        s = bn["gamma"] * jax.lax.rsqrt(bn["var"] + eps)      # [1, hidden]
        b = bn["beta"] - bn["mean"] * s
        scale = scale.at[i, :, :hidden].set(s)
        shift = shift.at[i, :, :hidden].set(b)

    return x_p, a_stack, w_stack, scale, shift, n_pad, h_pad


def gcn_forward(x, adjs, weights, bn_params, num_layers, hidden, eps=1e-5):
    assert num_layers >= 2, "reference module always builds >= 2 conv layers"
    n = x.shape[0]
    x_p, a_stack, w_stack, scale, shift, n_pad, h_pad = _prepare_inputs(
        x, adjs, weights, bn_params, num_layers, hidden, eps)

    # destination-row tile for the streamed A: >=512 rows keeps the HBM-bound A stream near roofline;
    # degenerates to a single tile for small graphs.
    tm = 512 if (n_pad % 512 == 0 and n_pad >= 512) else NODE_ALIGN
    num_row_tiles = n_pad // tm

    kernel = functools.partial(_gcn_kernel, num_layers=num_layers, hidden=hidden, tm=tm)

    # rough per-step VMEM footprint (double-buffered inputs + output + scratch carries)
    est = (2 * tm * n_pad * 1            # A tile (int8)
           + 2 * n_pad * h_pad * 2       # X slab (bf16, constant block)
           + 2 * h_pad * h_pad * 2       # W_l (bf16)
           + 2 * 2 * h_pad * 4 * 2       # scale/shift
           + 2 * tm * h_pad * 4          # output tile (f32)
           + 2 * n_pad * h_pad * 2)      # y + h scratch (bf16)
    # keep below the per-generation physical VMEM when scaling N (v5e/v6e: 128 MiB, v7x: 64 MiB)
    vmem_limit = int(max(2 * est, 32 * 1024 * 1024))

    out = pl.pallas_call(
        kernel,
        out_shape=jax.ShapeDtypeStruct((n_pad, h_pad), jnp.float32),
        grid=(num_layers, num_row_tiles),
        in_specs=[
            pl.BlockSpec((1, tm, n_pad), lambda l, r: (l, r, 0)),      # A_l: streamed per layer/tile
            pl.BlockSpec((n_pad, h_pad), lambda l, r: (0, 0)),         # X: constant block, DMA'd once
            pl.BlockSpec((1, h_pad, h_pad), lambda l, r: (l, 0, 0)),   # W_l
            pl.BlockSpec((1, 1, h_pad), lambda l, r: (l, 0, 0)),       # BN scale_l
            pl.BlockSpec((1, 1, h_pad), lambda l, r: (l, 0, 0)),       # BN shift_l
        ],
        out_specs=pl.BlockSpec((tm, h_pad), lambda l, r: (r, 0)),
        scratch_shapes=[
            pltpu.VMEM((n_pad, h_pad), jnp.bfloat16),   # y: activation carried across layers
            pltpu.VMEM((n_pad, h_pad), jnp.bfloat16),   # h: per-layer  y @ W_l
        ],
        compiler_params=pltpu.CompilerParams(
            # TODO(synk): on v7x the row-tile axis could be "parallel" (megacore) if the activation
            # carry were round-tripped through HBM per layer; with the VMEM carry it must stay arbitrary.
            dimension_semantics=("arbitrary", "arbitrary"),
            vmem_limit_bytes=vmem_limit,
        ),
    )(a_stack, x_p, w_stack, scale, shift)
    return out[:n, :hidden]


def gcn_reference(x, adjs, weights, bn_params, num_layers, hidden, eps=1e-5):
    """Pure-JAX mirror of the fused kernel's math (same matmul order / dtype path)."""
    x_p, a_stack, w_stack, scale, shift, _, _ = _prepare_inputs(
        x, adjs, weights, bn_params, num_layers, hidden, eps)
    f32, bf16 = jnp.float32, jnp.bfloat16
    y = x_p
    rows = None
    for l in range(num_layers):
        h = jnp.dot(y, w_stack[l], preferred_element_type=f32).astype(bf16)
        rows = jnp.dot(a_stack[l].astype(f32).astype(bf16), h, preferred_element_type=f32)
        if l != num_layers - 1:
            y = jnp.maximum(rows * scale[l] + shift[l], 0.0).astype(bf16)
    n = x.shape[0]
    return jax.nn.log_softmax(rows[:n, :hidden], axis=-1)


def xavier_uniform_relu(key, fan_in, fan_out):
    # torch xavier_uniform_ with gain = calculate_gain('relu') = sqrt(2), as in init_weights()
    gain = jnp.sqrt(2.0)
    bound = gain * jnp.sqrt(6.0 / (fan_in + fan_out))
    # stored as (fan_in, fan_out) so the kernel computes x @ W directly
    return jax.random.uniform(key, (fan_in, fan_out), jnp.float32, -bound, bound)


def make_gcn_params(key, in_channels, hidden_channels, num_layers):
    dims = [in_channels] + [hidden_channels] * num_layers
    weights, bn_params = [], []
    for i in range(num_layers):
        key, sub = jax.random.split(key)
        weights.append(xavier_uniform_relu(sub, dims[i], dims[i + 1]))
        c = dims[i + 1]
        bn_params.append(dict(
            gamma=jnp.ones((1, c), jnp.float32),
            beta=jnp.zeros((1, c), jnp.float32),
            mean=jnp.zeros((1, c), jnp.float32),   # running_mean
            var=jnp.ones((1, c), jnp.float32),     # running_var
        ))
    return weights, bn_params


def edge_index_to_dense(edge_index, num_nodes):
    # A[dst, src] += 1 for every edge (src, dst) — PyG 'source_to_target' flow,
    # edge weight 1 since normalize=False (no gcn_norm, no added self loops).
    src, dst = edge_index[0], edge_index[1]
    a = jnp.zeros((num_nodes, num_nodes), jnp.float32)
    return a.at[dst, src].add(1.0)


if __name__ == "__main__":
    key = jax.random.PRNGKey(0)

    N = 16                # number of nodes
    IN_CH = 4             # in_channels
    HIDDEN = 32           # hidden_channels
    OUT_CH = 8            # out_channels (unused by the reference module; kept for signature parity)
    NUM_LAYERS = 3
    NUM_EDGES = 48

    key, kx = jax.random.split(key)
    x = jax.random.normal(kx, (N, IN_CH), jnp.float32)

    # one edge_index per layer (the "adjs" list from NeighborSampler), densified
    adjs = []
    for _ in range(NUM_LAYERS):
        key, ks, kd = jax.random.split(key, 3)
        src = jax.random.randint(ks, (NUM_EDGES,), 0, N)
        dst = jax.random.randint(kd, (NUM_EDGES,), 0, N)
        adjs.append(edge_index_to_dense(jnp.stack([src, dst], axis=0), N))

    key, kp = jax.random.split(key)
    weights, bn_params = make_gcn_params(kp, IN_CH, HIDDEN, NUM_LAYERS)

    out = gcn_forward(x, adjs, weights, bn_params, NUM_LAYERS, HIDDEN)
    out = jax.block_until_ready(out)

    assert out.shape == (N, HIDDEN)
    # log_softmax rows must sum (in prob space) to ~1
    assert jnp.allclose(jnp.sum(jnp.exp(out), axis=-1), 1.0, atol=1e-3)
    # matches the pure-JAX mirror of the same math
    ref = gcn_reference(x, adjs, weights, bn_params, NUM_LAYERS, HIDDEN)
    assert jnp.allclose(out, ref, atol=1e-2, rtol=1e-2)
    print("KERNEL_OK")
</pallas_src>

<mosaic_0001>
module attributes {stable_mosaic.version = 11 : i64} {
  func.func @_gcn_kernel(%arg0: i32, %arg1: i32, %arg2: memref<1x256x256xi8, #tpu.memory_space<vmem>>, %arg3: memref<256x128xbf16, #tpu.memory_space<vmem>>, %arg4: memref<1x128x128xbf16, #tpu.memory_space<vmem>>, %arg5: memref<1x1x128xf32, #tpu.memory_space<vmem>>, %arg6: memref<1x1x128xf32, #tpu.memory_space<vmem>>, %arg7: memref<256x128xf32, #tpu.memory_space<vmem>>, %arg8: memref<256x128xbf16, #tpu.memory_space<vmem>>, %arg9: memref<256x128xbf16, #tpu.memory_space<vmem>>) attributes {dimension_semantics = [#tpu.dimension_semantics<arbitrary>, #tpu.dimension_semantics<arbitrary>], iteration_bounds = array<i64: 3, 1>, scalar_prefetch = 0 : i64, scratch_operands = 2 : i64, tpu.core_type = #tpu.core_type<tc>, window_params = [{transform_indices = @transform_0, window_bounds = array<i64: 1, 256, 256>}, {pipeline_mode = #tpu.pipeline_mode<synchronous>, transform_indices = @transform_1, window_bounds = array<i64: 256, 128>}, {transform_indices = @transform_2, window_bounds = array<i64: 1, 128, 128>}, {transform_indices = @transform_3, window_bounds = array<i64: 1, 1, 128>}, {transform_indices = @transform_4, window_bounds = array<i64: 1, 1, 128>}, {transform_indices = @transform_5, window_bounds = array<i64: 256, 128>}]} {
    %c0_i32 = arith.constant 0 : i32
    %0 = arith.cmpi eq, %arg1, %c0_i32 : i32
    %1 = arith.extui %0 : i1 to i32
    %c0_i32_0 = arith.constant 0 : i32
    %2 = arith.cmpi ne, %1, %c0_i32_0 : i32
    scf.if %2 {
      %c0_i32_8 = arith.constant 0 : i32
      %15 = arith.cmpi eq, %arg0, %c0_i32_8 : i32
      %16 = arith.extui %15 : i1 to i32
      %c0_i32_9 = arith.constant 0 : i32
      %17 = arith.cmpi ne, %16, %c0_i32_9 : i32
      scf.if %17 {
        %c0_12 = arith.constant 0 : index
        %c0_13 = arith.constant 0 : index
        %21 = vector.load %arg3[%c0_12, %c0_13] : memref<256x128xbf16, #tpu.memory_space<vmem>>, vector<256x128xbf16>
        %c0_14 = arith.constant 0 : index
        %c0_15 = arith.constant 0 : index
        %c0_16 = arith.constant 0 : index
        %22 = vector.load %arg4[%c0_14, %c0_15, %c0_16] : memref<1x128x128xbf16, #tpu.memory_space<vmem>>, vector<1x128x128xbf16>
        %23 = vector.shape_cast %22 : vector<1x128x128xbf16> to vector<128x128xbf16>
        %cst_17 = arith.constant dense<0.000000e+00> : vector<256x128xf32>
        %24 = tpu.matmul %21, %23, %cst_17 {dimension_numbers = #tpu.dot_dimension_numbers<[1], [0], [0], [1], [0, 0, 1, 1], [], []>} : vector<256x128xbf16>, vector<128x128xbf16>, vector<256x128xf32> -> vector<256x128xf32>
        %25 = arith.truncf %24 : vector<256x128xf32> to vector<256x128xbf16>
        %c0_18 = arith.constant 0 : index
        %c0_19 = arith.constant 0 : index
        %26 = vector.load %arg9[%c0_18, %c0_19] : memref<256x128xbf16, #tpu.memory_space<vmem>>, vector<256x128xbf16>
        tpu.vector_store %arg9[%c0_18, %c0_19], %25 {strides = array<i32>} : memref<256x128xbf16, #tpu.memory_space<vmem>>, vector<256x128xbf16>,
      } else {
      }
      %c0_i32_10 = arith.constant 0 : i32
      %18 = arith.cmpi ne, %arg0, %c0_i32_10 : i32
      %19 = arith.extui %18 : i1 to i32
      %c0_i32_11 = arith.constant 0 : i32
      %20 = arith.cmpi ne, %19, %c0_i32_11 : i32
      scf.if %20 {
        %c0_12 = arith.constant 0 : index
        %c0_13 = arith.constant 0 : index
        %21 = vector.load %arg8[%c0_12, %c0_13] : memref<256x128xbf16, #tpu.memory_space<vmem>>, vector<256x128xbf16>
        %c0_14 = arith.constant 0 : index
        %c0_15 = arith.constant 0 : index
        %c0_16 = arith.constant 0 : index
        %22 = vector.load %arg4[%c0_14, %c0_15, %c0_16] : memref<1x128x128xbf16, #tpu.memory_space<vmem>>, vector<1x128x128xbf16>
        %23 = vector.shape_cast %22 : vector<1x128x128xbf16> to vector<128x128xbf16>
        %cst_17 = arith.constant dense<0.000000e+00> : vector<256x128xf32>
        %24 = tpu.matmul %21, %23, %cst_17 {dimension_numbers = #tpu.dot_dimension_numbers<[1], [0], [0], [1], [0, 0, 1, 1], [], []>} : vector<256x128xbf16>, vector<128x128xbf16>, vector<256x128xf32> -> vector<256x128xf32>
        %25 = arith.truncf %24 : vector<256x128xf32> to vector<256x128xbf16>
        %c0_18 = arith.constant 0 : index
        %c0_19 = arith.constant 0 : index
        %26 = vector.load %arg9[%c0_18, %c0_19] : memref<256x128xbf16, #tpu.memory_space<vmem>>, vector<256x128xbf16>
        tpu.vector_store %arg9[%c0_18, %c0_19], %25 {strides = array<i32>} : memref<256x128xbf16, #tpu.memory_space<vmem>>, vector<256x128xbf16>,
      } else {
      }
    } else {
    }
    %c0 = arith.constant 0 : index
    %c0_1 = arith.constant 0 : index
    %c0_2 = arith.constant 0 : index
    %3 = vector.load %arg2[%c0, %c0_1, %c0_2] : memref<1x256x256xi8, #tpu.memory_space<vmem>>, vector<1x256x256xi8>
    %4 = vector.shape_cast %3 : vector<1x256x256xi8> to vector<256x256xi8>
    %5 = arith.sitofp %4 : vector<256x256xi8> to vector<256x256xf32>
    %6 = arith.truncf %5 : vector<256x256xf32> to vector<256x256xbf16>
    %c0_3 = arith.constant 0 : index
    %c0_4 = arith.constant 0 : index
    %7 = vector.load %arg9[%c0_3, %c0_4] : memref<256x128xbf16, #tpu.memory_space<vmem>>, vector<256x128xbf16>
    %cst = arith.constant dense<0.000000e+00> : vector<256x128xf32>
    %8 = tpu.matmul %6, %7, %cst {dimension_numbers = #tpu.dot_dimension_numbers<[1], [0], [0], [1], [0, 0, 1, 1], [], []>} : vector<256x256xbf16>, vector<256x128xbf16>, vector<256x128xf32> -> vector<256x128xf32>
    %c2_i32 = arith.constant 2 : i32
    %9 = arith.cmpi ne, %arg0, %c2_i32 : i32
    %10 = arith.extui %9 : i1 to i32
    %c0_i32_5 = arith.constant 0 : i32
    %11 = arith.cmpi ne, %10, %c0_i32_5 : i32
    scf.if %11 {
      %c0_8 = arith.constant 0 : index
      %c0_9 = arith.constant 0 : index
      %c0_10 = arith.constant 0 : index
      %15 = vector.load %arg5[%c0_8, %c0_9, %c0_10] : memref<1x1x128xf32, #tpu.memory_space<vmem>>, vector<1x1x128xf32>
      %16 = vector.shape_cast %15 : vector<1x1x128xf32> to vector<1x128xf32>
      %17 = vector.broadcast %16 : vector<1x128xf32> to vector<256x128xf32>
      %18 = arith.mulf %8, %17 : vector<256x128xf32>
      %c0_11 = arith.constant 0 : index
      %c0_12 = arith.constant 0 : index
      %c0_13 = arith.constant 0 : index
      %19 = vector.load %arg6[%c0_11, %c0_12, %c0_13] : memref<1x1x128xf32, #tpu.memory_space<vmem>>, vector<1x1x128xf32>
      %20 = vector.shape_cast %19 : vector<1x1x128xf32> to vector<1x128xf32>
      %21 = vector.broadcast %20 : vector<1x128xf32> to vector<256x128xf32>
      %22 = arith.addf %18, %21 : vector<256x128xf32>
      %cst_14 = arith.constant 0.000000e+00 : f32
      %23 = vector.broadcast %cst_14 : f32 to vector<256x128xf32>
      %24 = arith.maximumf %22, %23 : vector<256x128xf32>
      %c256_i32 = arith.constant 256 : i32
      %25 = arith.muli %arg1, %c256_i32 : i32
      %26 = tpu.assume_multiple %25, 256 : i32
      %27 = arith.truncf %24 : vector<256x128xf32> to vector<256x128xbf16>
      %28 = arith.index_cast %26 : i32 to index
      %c0_15 = arith.constant 0 : index
      %29 = vector.load %arg8[%28, %c0_15] : memref<256x128xbf16, #tpu.memory_space<vmem>>, vector<256x128xbf16>
      tpu.vector_store %arg8[%28, %c0_15], %27 {strides = array<i32>} : memref<256x128xbf16, #tpu.memory_space<vmem>>, vector<256x128xbf16>,
    } else {
    }
    %c2_i32_6 = arith.constant 2 : i32
    %12 = arith.cmpi eq, %arg0, %c2_i32_6 : i32
    %13 = arith.extui %12 : i1 to i32
    %c0_i32_7 = arith.constant 0 : i32
    %14 = arith.cmpi ne, %13, %c0_i32_7 : i32
    scf.if %14 {
      %15 = tpu.iota {dimensions = array<i32: 1>} : vector<256x128xi32>
      %c32_i32 = arith.constant 32 : i32
      %16 = vector.broadcast %c32_i32 : i32 to vector<256x128xi32>
      %17 = arith.cmpi slt, %15, %16 : vector<256x128xi32>
      %cst_8 = arith.constant -1.000000e+30 : f32
      %18 = vector.broadcast %cst_8 : f32 to vector<256x128xf32>
      %19 = arith.select %17, %8, %18 : vector<256x128xi1>, vector<256x128xf32>
      %cst_9 = arith.constant dense<0xFF800000> : vector<256xf32>
      %20 = vector.multi_reduction <maximumf>, %19, %cst_9 [1] : vector<256x128xf32> to vector<256xf32>
      %21 = vector.shape_cast %20 : vector<256xf32> to vector<256x1xf32>
      %22 = vector.broadcast %21 : vector<256x1xf32> to vector<256x128xf32>
      %23 = arith.subf %19, %22 : vector<256x128xf32>
      %24 = math.exp %23 : vector<256x128xf32>
      %cst_10 = arith.constant dense<0.000000e+00> : vector<256xf32>
      %25 = vector.multi_reduction <add>, %24, %cst_10 [1] : vector<256x128xf32> to vector<256xf32>
      %26 = vector.shape_cast %25 : vector<256xf32> to vector<256x1xf32>
      %27 = math.log %26 : vector<256x1xf32>
      %28 = vector.broadcast %27 : vector<256x1xf32> to vector<256x128xf32>
      %29 = arith.subf %23, %28 : vector<256x128xf32>
      %cst_11 = arith.constant 0.000000e+00 : f32
      %30 = vector.broadcast %cst_11 : f32 to vector<256x128xf32>
      %31 = arith.select %17, %29, %30 : vector<256x128xi1>, vector<256x128xf32>
      %c0_12 = arith.constant 0 : index
      %c0_13 = arith.constant 0 : index
      %32 = vector.load %arg7[%c0_12, %c0_13] : memref<256x128xf32, #tpu.memory_space<vmem>>, vector<256x128xf32>
      tpu.vector_store %arg7[%c0_12, %c0_13], %31 {strides = array<i32>} : memref<256x128xf32, #tpu.memory_space<vmem>>, vector<256x128xf32>,
    } else {
    }
    return
  }
  func.func @transform_0(%arg0: i32, %arg1: i32) -> (i32, i32, i32) {
    %c0_i32 = arith.constant 0 : i32
    %c0_i32_0 = arith.constant 0 : i32
    return %arg0, %arg1, %c0_i32 : i32, i32, i32
  }
  func.func @transform_1(%arg0: i32, %arg1: i32) -> (i32, i32) {
    %c0_i32 = arith.constant 0 : i32
    %c0_i32_0 = arith.constant 0 : i32
    %c0_i32_1 = arith.constant 0 : i32
    return %c0_i32, %c0_i32_0 : i32, i32
  }
  func.func @transform_2(%arg0: i32, %arg1: i32) -> (i32, i32, i32) {
    %c0_i32 = arith.constant 0 : i32
    %c0_i32_0 = arith.constant 0 : i32
    %c0_i32_1 = arith.constant 0 : i32
    return %arg0, %c0_i32, %c0_i32_0 : i32, i32, i32
  }
  func.func @transform_3(%arg0: i32, %arg1: i32) -> (i32, i32, i32) {
    %c0_i32 = arith.constant 0 : i32
    %c0_i32_0 = arith.constant 0 : i32
    %c0_i32_1 = arith.constant 0 : i32
    return %arg0, %c0_i32, %c0_i32_0 : i32, i32, i32
  }
  func.func @transform_4(%arg0: i32, %arg1: i32) -> (i32, i32, i32) {
    %c0_i32 = arith.constant 0 : i32
    %c0_i32_0 = arith.constant 0 : i32
    %c0_i32_1 = arith.constant 0 : i32
    return %arg0, %c0_i32, %c0_i32_0 : i32, i32, i32
  }
  func.func @transform_5(%arg0: i32, %arg1: i32) -> (i32, i32) {
    %c0_i32 = arith.constant 0 : i32
    %c0_i32_0 = arith.constant 0 : i32
    return %arg1, %c0_i32 : i32, i32
  }
}

</mosaic_0001>

<llo_original>
// kernel: tpu_custom_call.1
$region0: #{tpu_custom_call.1}
  #allocation0 [shape = 'u32[]', space=smem, size = 0x4, offset = 0x4, fixed_abs, tag = 'smem constant byte address 0x4 - core index']
  #allocation1 [shape = 'u32[72,128]{1,0:T(1,128)}', space=vmem, size = 0x9000, scoped, tag = 'internal scratch']
  #allocation2 [shape = 'bf16[256,128]{1,0:T(8,128)(2,1)}', space=vmem, size = 0x10000, scoped, tag = 'scratch operand']
  #allocation3 [shape = 'bf16[256,128]{1,0:T(8,128)(2,1)}', space=vmem, size = 0x10000, scoped, tag = 'scratch operand']
  %s0 = inlined_call_operand.hbm [shape: s8[3,256,256], index: 0, kind: input, shape index: {}]
  %s1 = inlined_call_operand.hbm [shape: bf16[256,128], index: 1, kind: input, shape index: {}]
  %s2 = inlined_call_operand.hbm [shape: bf16[3,128,128], index: 2, kind: input, shape index: {}]
  %s3 = inlined_call_operand.hbm [shape: f32[3,1,128], index: 3, kind: input, shape index: {}]
  %s4 = inlined_call_operand.vmem [shape: f32[3,1,128], index: 4, kind: input, shape index: {}]
  %s5 = inlined_call_operand.hbm [shape: f32[256,128], index: 5, kind: output, shape index: {}]
  %s6 = sld [smem:[#allocation0]]
  $region89: #{tpu_custom_call.1} parent=0
    _
  %s8 = ssub.s32 1, %s6
  %s9 = scalar_select 0, %s8, %s6
  $region1: #{tpu_custom_call.1} parent=0
    #allocation4 [shape = 'u8[131072]{0}', space=vmem, size = 0x20000, scoped, tag = 'input window, operand 0']
    #allocation5 [shape = 's32[2]{0}', space=sflag, size = 0x8, scoped, tag = 'scoped memory for tpu_custom_call.1']
    #allocation6 [shape = 's32[2]{0}', space=sflag, size = 0x8, scoped, tag = 'scoped memory for tpu_custom_call.1']
    #allocation7 [shape = 'u8[65536]{0}', space=vmem, size = 0x10000, scoped, tag = 'input window, operand 1, single buffered']
    #allocation8 [shape = 's32[1]{0}', space=sflag, size = 0x4, scoped, tag = 'scoped memory for tpu_custom_call.1']
    #allocation9 [shape = 'u8[65536]{0}', space=vmem, size = 0x10000, scoped, tag = 'input window, operand 2']
    #allocation10 [shape = 'u8[1024]{0}', space=vmem, size = 0x400, scoped, tag = 'input window, operand 3']
    #allocation11 [shape = 'u8[131072]{0}', space=vmem, size = 0x20000, scoped, tag = 'output window, operand 0, single buffered']
    %10 = vsyncpa [#allocation5], 0
    %s11 = scalar_lea.sflag [#allocation5], 1
    %12 = vsyncpa %s11, 0
    %13 = vsyncpa [#allocation8], 0
    %14 = vsyncpa [#allocation6], 0
    loop: start=0, step=1, limit=5
    $region2: #{tpu_custom_call.1} parent=1 // loop_pre_header
      _
    $region3: #{tpu_custom_call.1} parent=1 // loop_header
      %s16 = sphi 0, %s20
      %p17 = scmp.ge.s32.totalorder %s16, 5
      %s23 = sphi 0, %s35
      %s24 = sphi 0, %s31
      %s25 = sphi 0, %s23
      %s26 = sphi 0, %s24
      %s27 = sphi 0, %s25
      %s28 = sphi 0, %s26
      %s40 = sphi 0, %s42
      %s43 = sphi 0, %s40
      %s44 = sphi 0, %s43
      %s60 = sphi 0, %s44
      %s64 = sphi 0, %s64
      %s66 = sphi 0, %s64
      %s67 = sphi 0, %s66
      %s81 = sphi 0, %s67
      %s87 = sphi 0, %s89
      %s90 = sphi 0, %s87
      %s91 = sphi 0, %s90
      %s107 = sphi 0, %s91
      %s113 = sphi 0, %s115
      %s116 = sphi 0, %s113
      %s117 = sphi 0, %s116
      %s133 = sphi 0, %s117
      %s139 = sphi 0, %s141
      %s142 = sphi 0, %s139
      %s143 = sphi 0, %s142
      %s159 = sphi 0, %s143
      %s165 = sphi 0, %s167
      %s168 = sphi 0, %s165
      %s169 = sphi 0, %s168
      %s185 = sphi 0, %s169
    $region4: #{tpu_custom_call.1} parent=1 // loop_header_branch
      %19 = sbr.rel (%p17) target = $region8
    $region5: #{tpu_custom_call.1} parent=1 // loop_body
      %s21 = ssub.s32 %s16, 1
      %s22 = ssub.s32 %s16, 2
      %s29 = sadd.s32 1, %s24
      %p30 = scmp.ge.s32.totalorder %s29, 1
      %s31 = scalar_select %p30, 0, %s29
      %s32 = sadd.s32 1, %s23
      %s33 = scalar_select %p30, %s32, %s23
      %p34 = scmp.ge.s32.totalorder %s33, 3
      %s35 = scalar_select %p34, 0, %s33
      %s36 = ssub.s32 %s23, %s35
      %s37 = ssub.s32 %s24, %s31
      %s38 = sor.u32 %s36, %s37
      %p39 = scmp.eq.s32.totalorder %s38, 0
      %s41 = sadd.s32 %s40, 1
      %s42 = scalar_select %p39, %s40, %s41
      %p45 = pneg %p39
      %p46 = scmp.eq.s32.totalorder %s16, 2
      %p47 = por %p45, %p46
      %p48 = scmp.ne.s32.totalorder %s40, %s43
      %p49 = scmp.eq.s32.totalorder %s16, 0
      %p50 = por %p48, %p49
      %p51 = scmp.ne.s32.totalorder %s40, %s43
      %p52 = scmp.eq.s32.totalorder %s21, 2
      %p53 = por %p51, %p52
      %p54 = scmp.ne.s32.totalorder %s43, %s44
      %p55 = scmp.eq.s32.totalorder %s21, 0
      %p56 = por %p54, %p55
      %p57 = scmp.ne.s32.totalorder %s43, %s44
      %p58 = scmp.eq.s32.totalorder %s22, 2
      %p59 = por %p57, %p58
      %p61 = scmp.ne.s32.totalorder %s44, %s60
      %p62 = scmp.eq.s32.totalorder %s22, 0
      %p63 = por %p61, %p62
      %s65 = sadd.s32 %s64, 1
      %p68 = scmp.eq.s32.totalorder %s16, 2
      %p69 = scmp.ne.s32.totalorder %s64, %s66
      %p70 = scmp.eq.s32.totalorder %s16, 0
      %p71 = por %p69, %p70
      %p72 = scmp.ne.s32.totalorder %s64, %s66
      %p73 = scmp.eq.s32.totalorder %s21, 2
      %p74 = por %p72, %p73
      %p75 = scmp.ne.s32.totalorder %s66, %s67
      %p76 = scmp.eq.s32.totalorder %s21, 0
      %p77 = por %p75, %p76
      %p78 = scmp.ne.s32.totalorder %s66, %s67
      %p79 = scmp.eq.s32.totalorder %s22, 2
      %p80 = por %p78, %p79
      %p82 = scmp.ne.s32.totalorder %s67, %s81
      %p83 = scmp.eq.s32.totalorder %s22, 0
      %p84 = por %p82, %p83
      %s85 = ssub.s32 %s23, %s35
      %p86 = scmp.eq.s32.totalorder %s85, 0
      %s88 = sadd.s32 %s87, 1
      %s89 = scalar_select %p86, %s87, %s88
      %p92 = pneg %p86
      %p93 = scmp.eq.s32.totalorder %s16, 2
      %p94 = por %p92, %p93
      %p95 = scmp.ne.s32.totalorder %s87, %s90
      %p96 = scmp.eq.s32.totalorder %s16, 0
      %p97 = por %p95, %p96
      %p98 = scmp.ne.s32.totalorder %s87, %s90
      %p99 = scmp.eq.s32.totalorder %s21, 2
      %p100 = por %p98, %p99
      %p101 = scmp.ne.s32.totalorder %s90, %s91
      %p102 = scmp.eq.s32.totalorder %s21, 0
      %p103 = por %p101, %p102
      %p104 = scmp.ne.s32.totalorder %s90, %s91
      %p105 = scmp.eq.s32.totalorder %s22, 2
      %p106 = por %p104, %p105
      %p108 = scmp.ne.s32.totalorder %s91, %s107
      %p109 = scmp.eq.s32.totalorder %s22, 0
      %p110 = por %p108, %p109
      %s111 = ssub.s32 %s23, %s35
      %p112 = scmp.eq.s32.totalorder %s111, 0
      %s114 = sadd.s32 %s113, 1
      %s115 = scalar_select %p112, %s113, %s114
      %p118 = pneg %p112
      %p119 = scmp.eq.s32.totalorder %s16, 2
      %p120 = por %p118, %p119
      %p121 = scmp.ne.s32.totalorder %s113, %s116
      %p122 = scmp.eq.s32.totalorder %s16, 0
      %p123 = por %p121, %p122
      %p124 = scmp.ne.s32.totalorder %s113, %s116
      %p125 = scmp.eq.s32.totalorder %s21, 2
      %p126 = por %p124, %p125
      %p127 = scmp.ne.s32.totalorder %s116, %s117
      %p128 = scmp.eq.s32.totalorder %s21, 0
      %p129 = por %p127, %p128
      %p130 = scmp.ne.s32.totalorder %s116, %s117
      %p131 = scmp.eq.s32.totalorder %s22, 2
      %p132 = por %p130, %p131
      %p134 = scmp.ne.s32.totalorder %s117, %s133
      %p135 = scmp.eq.s32.totalorder %s22, 0
      %p136 = por %p134, %p135
      %s137 = ssub.s32 %s23, %s35
      %p138 = scmp.eq.s32.totalorder %s137, 0
      %s140 = sadd.s32 %s139, 1
      %s141 = scalar_select %p138, %s139, %s140
      %p144 = pneg %p138
      %p145 = scmp.eq.s32.totalorder %s16, 2
      %p146 = por %p144, %p145
      %p147 = scmp.ne.s32.totalorder %s139, %s142
      %p148 = scmp.eq.s32.totalorder %s16, 0
      %p149 = por %p147, %p148
      %p150 = scmp.ne.s32.totalorder %s139, %s142
      %p151 = scmp.eq.s32.totalorder %s21, 2
      %p152 = por %p150, %p151
      %p153 = scmp.ne.s32.totalorder %s142, %s143
      %p154 = scmp.eq.s32.totalorder %s21, 0
      %p155 = por %p153, %p154
      %p156 = scmp.ne.s32.totalorder %s142, %s143
      %p157 = scmp.eq.s32.totalorder %s22, 2
      %p158 = por %p156, %p157
      %p160 = scmp.ne.s32.totalorder %s143, %s159
      %p161 = scmp.eq.s32.totalorder %s22, 0
      %p162 = por %p160, %p161
      %s163 = ssub.s32 %s24, %s31
      %p164 = scmp.eq.s32.totalorder %s163, 0
      %s166 = sadd.s32 %s165, 1
      %s167 = scalar_select %p164, %s165, %s166
      %p170 = pneg %p164
      %p171 = scmp.eq.s32.totalorder %s16, 2
      %p172 = por %p170, %p171
      %p173 = scmp.ne.s32.totalorder %s165, %s168
      %p174 = scmp.eq.s32.totalorder %s16, 0
      %p175 = por %p173, %p174
      %p176 = scmp.ne.s32.totalorder %s165, %s168
      %p177 = scmp.eq.s32.totalorder %s21, 2
      %p178 = por %p176, %p177
      %p179 = scmp.ne.s32.totalorder %s168, %s169
      %p180 = scmp.eq.s32.totalorder %s21, 0
      %p181 = por %p179, %p180
      %p182 = scmp.ne.s32.totalorder %s168, %s169
      %p183 = scmp.eq.s32.totalorder %s22, 2
      %p184 = por %p182, %p183
      %p186 = scmp.ne.s32.totalorder %s169, %s185
      %p187 = scmp.eq.s32.totalorder %s22, 0
      %p188 = por %p186, %p187
      %p189 = scmp.le.s32.totalorder 1, %s16
      %p190 = scmp.lt.s32.totalorder %s16, 4
      %p191 = pnand %p189, %p190
      %p192 = pneg %p191
      // Predicated region
      $region9: #{tpu_custom_call.1} parent=5 // pred_check
        _
      $region10: #{tpu_custom_call.1} parent=5 // pred_check_branch
        %194 = sbr.rel (%p191) target = $region12
      $region11: #{tpu_custom_call.1} parent=5 // pred_region
        %s195 = ssub.s32 %s16, 1
        // Predicated region
        $region13: #{tpu_custom_call.1} parent=11 // pred_check
          %p196 = pneg %p77
        $region14: #{tpu_custom_call.1} parent=11 // pred_check_branch
          %198 = sbr.rel (%p196) target = $region16
        $region15: #{tpu_custom_call.1} parent=11 // pred_region
          %200 = vsyncadd [#allocation8], 0
          %s201 = sshll.u32 %s1, 4
          %s202 = int_to_ptr.hbm [resolvable:$true] %s201
          %s203 = sshll.u32 [#allocation7], 4
          %s204 = int_to_ptr.vmem [resolvable:$true] %s203
          %209 = dma.hbm_to_vmem [thread:$0]  %s202, 2048, %s204, [#allocation8], 64, 64, 4
        $region16: #{tpu_custom_call.1} parent=11 // pred_fallthru
          _
      $region12: #{tpu_custom_call.1} parent=5 // pred_fallthru
        _
      %p210 = scmp.lt.s32.totalorder %s16, 3
      // Predicated region
      $region17: #{tpu_custom_call.1} parent=5 // pred_check
        %p211 = pneg %p210
      $region18: #{tpu_custom_call.1} parent=5 // pred_check_branch
        %213 = sbr.rel (%p211) target = $region20
      $region19: #{tpu_custom_call.1} parent=5 // pred_region
        // Predicated region
        $region21: #{tpu_custom_call.1} parent=19 // pred_check
          %p214 = pneg %p50
        $region22: #{tpu_custom_call.1} parent=19 // pred_check_branch
          %216 = sbr.rel (%p214) target = $region24
        $region23: #{tpu_custom_call.1} parent=19 // pred_region
          %s217 = sand.u32 %s16, 1
          %s218 = scalar_lea.sflag [#allocation5], %s217
          %s219 = sand.u32 %s40, 1
          %s220 = smul.addr %s219, 128
          %s221 = scalar_lea.vmem [#allocation4], %s220
          %s222 = smul.u32 8, %s24
          %224 = vsyncadd %s218, 0
          %s225 = smul.addr %s222, 2
          %s226 = smul.addr %s23, 16
          %s227 = sadd.s32 %s225, %s226
          %s228 = smul.addr %s227, 8
          %s229 = scalar_lea.hbm %s0, %s228
          %s230 = sshll.u32 %s229, 4
          %s231 = int_to_ptr.hbm [resolvable:$true] %s230
          %s232 = sshll.u32 %s221, 4
          %s233 = int_to_ptr.vmem [resolvable:$true] %s232
          %238 = dma.hbm_to_vmem [thread:$0]  %s231, 2048, %s233, %s218, 256, 256, 16
        $region24: #{tpu_custom_call.1} parent=19 // pred_fallthru
          _
        // Predicated region
        $region25: #{tpu_custom_call.1} parent=19 // pred_check
          %p239 = pneg %p97
        $region26: #{tpu_custom_call.1} parent=19 // pred_check_branch
          %241 = sbr.rel (%p239) target = $region28
        $region27: #{tpu_custom_call.1} parent=19 // pred_region
          %s242 = sand.u32 %s16, 1
          %s243 = scalar_lea.sflag [#allocation5], %s242
          %s244 = sand.u32 %s87, 1
          %s245 = smul.addr %s244, 64
          %s246 = scalar_lea.vmem [#allocation9], %s245
          %248 = vsyncadd %s243, 0
          %s249 = smul.addr %s23, 16
          %s250 = smul.addr %s249, 4
          %s251 = scalar_lea.hbm %s2, %s250
          %s252 = sshll.u32 %s251, 4
          %s253 = int_to_ptr.hbm [resolvable:$true] %s252
          %s254 = sshll.u32 %s246, 4
          %s255 = int_to_ptr.vmem [resolvable:$true] %s254
          %260 = dma.hbm_to_vmem [thread:$0]  %s253, 1024, %s255, %s243, 64, 64, 4
        $region28: #{tpu_custom_call.1} parent=19 // pred_fallthru
          _
        // Predicated region
        $region29: #{tpu_custom_call.1} parent=19 // pred_check
          %p261 = pneg %p123
        $region30: #{tpu_custom_call.1} parent=19 // pred_check_branch
          %263 = sbr.rel (%p261) target = $region32
        $region31: #{tpu_custom_call.1} parent=19 // pred_region
          %s264 = sand.u32 %s16, 1
          %s265 = scalar_lea.sflag [#allocation5], %s264
          %s266 = sand.u32 %s113, 1
          %s267 = scalar_lea.vmem [#allocation10], %s266
          %269 = vsyncadd %s265, 0
          %s270 = scalar_lea.hbm %s3, %s23
          %s272 = sshll.u32 %s270, 4
          %s273 = int_to_ptr.hbm [resolvable:$true] %s272
          %s274 = sshll.u32 %s267, 4
          %s275 = int_to_ptr.vmem [resolvable:$true] %s274
          %277 = dma.hbm_to_vmem [thread:$0]  %s273, 16, %s275, %s265
        $region32: #{tpu_custom_call.1} parent=19 // pred_fallthru
          _
        // Predicated region
        $region33: #{tpu_custom_call.1} parent=19 // pred_check
          %p278 = pneg %p149
        $region34: #{tpu_custom_call.1} parent=19 // pred_check_branch
          %280 = sbr.rel (%p278) target = $region36
        $region35: #{tpu_custom_call.1} parent=19 // pred_region
          %p281 = scmp.lt.s32.totalorder %s23, 2
          %s282 = scalar_select %p281, %s23, 2
          %s283 = scalar_lea.vmem %s4, %s282
        $region36: #{tpu_custom_call.1} parent=19 // pred_fallthru
          _
      $region20: #{tpu_custom_call.1} parent=5 // pred_fallthru
        _
      %p284 = scmp.le.s32.totalorder 1, %s16
      %p285 = scmp.lt.s32.totalorder %s16, 4
      %p286 = pnand %p284, %p285
      %p287 = pneg %p286
      // Predicated region
      $region37: #{tpu_custom_call.1} parent=5 // pred_check
        _
      $region38: #{tpu_custom_call.1} parent=5 // pred_check_branch
        %289 = sbr.rel (%p286) target = $region40
      $region39: #{tpu_custom_call.1} parent=5 // pred_region
        %s290 = ssub.s32 %s16, 1
        %s291 = sand.u32 %s21, 1
        %s292 = scalar_lea.sflag [#allocation5], %s291
        %s293 = sand.u32 %s43, 1
        %s294 = smul.addr %s293, 128
        %s295 = scalar_lea.vmem [#allocation4], %s294
        // Predicated region
        $region41: #{tpu_custom_call.1} parent=39 // pred_check
          %p296 = pneg %p56
        $region42: #{tpu_custom_call.1} parent=39 // pred_check_branch
          %298 = sbr.rel (%p296) target = $region44
        $region43: #{tpu_custom_call.1} parent=39 // pred_region
          %300 = dma.done %s292, 2048
        $region44: #{tpu_custom_call.1} parent=39 // pred_fallthru
          _
        // Predicated region
        $region45: #{tpu_custom_call.1} parent=39 // pred_check
          %p301 = pneg %p77
        $region46: #{tpu_custom_call.1} parent=39 // pred_check_branch
          %303 = sbr.rel (%p301) target = $region48
        $region47: #{tpu_custom_call.1} parent=39 // pred_region
          %305 = dma.done [#allocation8], 2048
        $region48: #{tpu_custom_call.1} parent=39 // pred_fallthru
          _
        %s306 = sand.u32 %s21, 1
        %s307 = scalar_lea.sflag [#allocation5], %s306
        %s308 = sand.u32 %s90, 1
        %s309 = smul.addr %s308, 64
        %s310 = scalar_lea.vmem [#allocation9], %s309
        // Predicated region
        $region49: #{tpu_custom_call.1} parent=39 // pred_check
          %p311 = pneg %p103
        $region50: #{tpu_custom_call.1} parent=39 // pred_check_branch
          %313 = sbr.rel (%p311) target = $region52
        $region51: #{tpu_custom_call.1} parent=39 // pred_region
          %315 = dma.done %s307, 1024
        $region52: #{tpu_custom_call.1} parent=39 // pred_fallthru
          _
        %s316 = sand.u32 %s21, 1
        %s317 = scalar_lea.sflag [#allocation5], %s316
        %s318 = sand.u32 %s116, 1
        %s319 = scalar_lea.vmem [#allocation10], %s318
        // Predicated region
        $region53: #{tpu_custom_call.1} parent=39 // pred_check
          %p320 = pneg %p129
        $region54: #{tpu_custom_call.1} parent=39 // pred_check_branch
          %322 = sbr.rel (%p320) target = $region56
        $region55: #{tpu_custom_call.1} parent=39 // pred_region
          %324 = dma.done %s317, 16
        $region56: #{tpu_custom_call.1} parent=39 // pred_fallthru
          _
        %s325 = sand.u32 %s21, 1
        %s326 = scalar_lea.sflag [#allocation5], %s325
        %s327 = sand.u32 %s43, 1
        %s328 = smul.addr %s327, 128
        %s329 = scalar_lea.vmem [#allocation4], %s328
        %p330 = pneg %p56
        %p331 = pneg %p53
        %p332 = pneg %p77
        %p333 = pneg %p74
        %s334 = sand.u32 %s21, 1
        %s335 = scalar_lea.sflag [#allocation5], %s334
        %s336 = sand.u32 %s90, 1
        %s337 = smul.addr %s336, 64
        %s338 = scalar_lea.vmem [#allocation9], %s337
        %p339 = pneg %p103
        %p340 = pneg %p100
        %s341 = sand.u32 %s21, 1
        %s342 = scalar_lea.sflag [#allocation5], %s341
        %s343 = sand.u32 %s116, 1
        %s344 = scalar_lea.vmem [#allocation10], %s343
        %p345 = pneg %p129
        %p346 = pneg %p126
        %p347 = scmp.lt.s32.totalorder %s25, 2
        %s348 = scalar_select %p347, %s25, 2
        %s349 = scalar_lea.vmem %s4, %s348
        %p350 = pneg %p155
        %p351 = pneg %p152
        %p352 = pneg %p181
        %p353 = pneg %p178
        %s354 = smul.u32 8, %s26
        %p355 = scmp.lt.s32.totalorder %s25, 2
        %s356 = scalar_select %p355, %s25, 2
        %s357 = scalar_lea.vmem %s4, %s356
        %s358 = smul.u32 32, %s26
        %p359 = scmp.eq.s32.totalorder %s26, 0
        // Predicated region
        $region57: #{tpu_custom_call.1} parent=39 // pred_check
          %p360 = pneg %p359
        $region58: #{tpu_custom_call.1} parent=39 // pred_check_branch
          %362 = sbr.rel (%p360) target = $region60
        $region59: #{tpu_custom_call.1} parent=39 // pred_region
          %p363 = scmp.eq.s32.totalorder %s25, 0
          // Predicated region
          $region61: #{tpu_custom_call.1} parent=59 // pred_check
            %p364 = pneg %p363
          $region62: #{tpu_custom_call.1} parent=59 // pred_check_branch
            %366 = sbr.rel (%p364) target = $region64
          $region63: #{tpu_custom_call.1} parent=59 // pred_region
            %v367 = vld [vmem:[#allocation7] sm:$0xf]
            %v368 = vld [vmem:[#allocation7 + $0x4] sm:$0xf]
            %v369 = vld [vmem:[#allocation7 + $0x8] sm:$0xf]
            %v370 = vld [vmem:[#allocation7 + $0xc] sm:$0xf]
            %v371 = vld [vmem:[#allocation7 + $0x10] sm:$0xf]
            %v372 = vld [vmem:[#allocation7 + $0x14] sm:$0xf]
            %v373 = vld [vmem:[#allocation7 + $0x18] sm:$0xf]
            %v374 = vld [vmem:[#allocation7 + $0x1c] sm:$0xf]
            %v375 = vld [vmem:[#allocation7 + $0x20] sm:$0xf]
            %v376 = vld [vmem:[#allocation7 + $0x24] sm:$0xf]
            %v377 = vld [vmem:[#allocation7 + $0x28] sm:$0xf]
            %v378 = vld [vmem:[#allocation7 + $0x2c] sm:$0xf]
            %v379 = vld [vmem:[#allocation7 + $0x30] sm:$0xf]
            %v380 = vld [vmem:[#allocation7 + $0x34] sm:$0xf]
            %v381 = vld [vmem:[#allocation7 + $0x38] sm:$0xf]
            %v382 = vld [vmem:[#allocation7 + $0x3c] sm:$0xf]
            %v383 = vld [vmem:[#allocation7 + $0x40] sm:$0xf]
            %v384 = vld [vmem:[#allocation7 + $0x44] sm:$0xf]
            %v385 = vld [vmem:[#allocation7 + $0x48] sm:$0xf]
            %v386 = vld [vmem:[#allocation7 + $0x4c] sm:$0xf]
            %v387 = vld [vmem:[#allocation7 + $0x50] sm:$0xf]
            %v388 = vld [vmem:[#allocation7 + $0x54] sm:$0xf]
            %v389 = vld [vmem:[#allocation7 + $0x58] sm:$0xf]
            %v390 = vld [vmem:[#allocation7 + $0x5c] sm:$0xf]
            %v391 = vld [vmem:[#allocation7 + $0x60] sm:$0xf]
            %v392 = vld [vmem:[#allocation7 + $0x64] sm:$0xf]
            %v393 = vld [vmem:[#allocation7 + $0x68] sm:$0xf]
            %v394 = vld [vmem:[#allocation7 + $0x6c] sm:$0xf]
            %v395 = vld [vmem:[#allocation7 + $0x70] sm:$0xf]
            %v396 = vld [vmem:[#allocation7 + $0x74] sm:$0xf]
            %v397 = vld [vmem:[#allocation7 + $0x78] sm:$0xf]
            %v398 = vld [vmem:[#allocation7 + $0x7c] sm:$0xf]
            %v399 = vld [vmem:[%s310] sm:$0xf]
            %v400 = vld [vmem:[%s310 + $0x4] sm:$0xf]
            %v401 = vld [vmem:[%s310 + $0x8] sm:$0xf]
            %v402 = vld [vmem:[%s310 + $0xc] sm:$0xf]
            %v403 = vld [vmem:[%s310 + $0x10] sm:$0xf]
            %v404 = vld [vmem:[%s310 + $0x14] sm:$0xf]
            %v405 = vld [vmem:[%s310 + $0x18] sm:$0xf]
            %v406 = vld [vmem:[%s310 + $0x1c] sm:$0xf]
            %v407 = vld [vmem:[%s310 + $0x20] sm:$0xf]
            %v408 = vld [vmem:[%s310 + $0x24] sm:$0xf]
            %v409 = vld [vmem:[%s310 + $0x28] sm:$0xf]
            %v410 = vld [vmem:[%s310 + $0x2c] sm:$0xf]
            %v411 = vld [vmem:[%s310 + $0x30] sm:$0xf]
            %v412 = vld [vmem:[%s310 + $0x34] sm:$0xf]
            %v413 = vld [vmem:[%s310 + $0x38] sm:$0xf]
            %v414 = vld [vmem:[%s310 + $0x3c] sm:$0xf]
            %v447 = vunpack.c.l.b16 %v367
            %v448 = vunpack.c.l.b16 %v368
            %v449 = vunpack.c.l.b16 %v369
            %v450 = vunpack.c.l.b16 %v370
            %v451 = vunpack.c.l.b16 %v371
            %v452 = vunpack.c.l.b16 %v372
            %v453 = vunpack.c.l.b16 %v373
            %v454 = vunpack.c.l.b16 %v374
            %v455 = vunpack.c.l.b16 %v375
            %v456 = vunpack.c.l.b16 %v376
            %v457 = vunpack.c.l.b16 %v377
            %v458 = vunpack.c.l.b16 %v378
            %v459 = vunpack.c.l.b16 %v379
            %v460 = vunpack.c.l.b16 %v380
            %v461 = vunpack.c.l.b16 %v381
            %v462 = vunpack.c.l.b16 %v382
            %v463 = vunpack.c.l.b16 %v383
            %v464 = vunpack.c.l.b16 %v384
            %v465 = vunpack.c.l.b16 %v385
            %v466 = vunpack.c.l.b16 %v386
            %v467 = vunpack.c.l.b16 %v387
            %v468 = vunpack.c.l.b16 %v388
            %v469 = vunpack.c.l.b16 %v389
            %v470 = vunpack.c.l.b16 %v390
            %v471 = vunpack.c.l.b16 %v391
            %v472 = vunpack.c.l.b16 %v392
            %v473 = vunpack.c.l.b16 %v393
            %v474 = vunpack.c.l.b16 %v394
            %v475 = vunpack.c.l.b16 %v395
            %v476 = vunpack.c.l.b16 %v396
            %v477 = vunpack.c.l.b16 %v397
            %v478 = vunpack.c.l.b16 %v398
            %v479 = vpack.c.b16 %v448, %v447
            %v480 = vpack.c.b16 %v450, %v449
            %v481 = vpack.c.b16 %v452, %v451
            %v482 = vpack.c.b16 %v454, %v453
            %v483 = vpack.c.b16 %v456, %v455
            %v484 = vpack.c.b16 %v458, %v457
            %v485 = vpack.c.b16 %v460, %v459
            %v486 = vpack.c.b16 %v462, %v461
            %v487 = vpack.c.b16 %v464, %v463
            %v488 = vpack.c.b16 %v466, %v465
            %v489 = vpack.c.b16 %v468, %v467
            %v490 = vpack.c.b16 %v470, %v469
            %v491 = vpack.c.b16 %v472, %v471
            %v492 = vpack.c.b16 %v474, %v473
            %v493 = vpack.c.b16 %v476, %v475
            %v494 = vpack.c.b16 %v478, %v477
            %v527 = vunpack.c.l.b16 %v399
            %v528 = vunpack.c.l.b16 %v400
            %v529 = vunpack.c.l.b16 %v401
            %v530 = vunpack.c.l.b16 %v402
            %v531 = vunpack.c.l.b16 %v403
            %v532 = vunpack.c.l.b16 %v404
            %v533 = vunpack.c.l.b16 %v405
            %v534 = vunpack.c.l.b16 %v406
            %v535 = vunpack.c.l.b16 %v407
            %v536 = vunpack.c.l.b16 %v408
            %v537 = vunpack.c.l.b16 %v409
            %v538 = vunpack.c.l.b16 %v410
            %v539 = vunpack.c.l.b16 %v411
            %v540 = vunpack.c.l.b16 %v412
            %v541 = vunpack.c.l.b16 %v413
            %v542 = vunpack.c.l.b16 %v414
            %v543 = vpack.c.b16 %v528, %v527
            %v544 = vpack.c.b16 %v530, %v529
            %v545 = vpack.c.b16 %v532, %v531
            %v546 = vpack.c.b16 %v534, %v533
            %v547 = vpack.c.b16 %v536, %v535
            %v548 = vpack.c.b16 %v538, %v537
            %v549 = vpack.c.b16 %v540, %v539
            %v550 = vpack.c.b16 %v542, %v541
            %559 = vmatpush.bf16.msra.mxu0 %v550
            %560 = vmatpush.bf16.msra.mxu0 %v549
            %561 = vmatpush.bf16.msra.mxu0 %v548
            %562 = vmatpush.bf16.msra.mxu0 %v547
            %563 = vmatpush.bf16.msra.mxu0 %v546
            %564 = vmatpush.bf16.msra.mxu0 %v545
            %565 = vmatpush.bf16.msra.mxu0 %v544
            %566 = vmatpush.bf16.msra.mxu0 %v543
            %567 = vmatmul.bf16.gmra.mxu0 %v479
            %v568 = vpop.f32.mrf.mxu0
            %v569 = vadd.f32 0.0, %v568
            %v570 = vpop.f32.mrf.mxu0
            %v571 = vadd.f32 0.0, %v570
            %572 = vmatmul.bf16.gmra.mxu0 %v480
            %v573 = vpop.f32.mrf.mxu0
            %v574 = vadd.f32 0.0, %v573
            %v575 = vpop.f32.mrf.mxu0
            %v576 = vadd.f32 0.0, %v575
            %577 = vmatmul.bf16.gmra.mxu0 %v481
            %v578 = vpop.f32.mrf.mxu0
            %v579 = vadd.f32 0.0, %v578
            %v580 = vpop.f32.mrf.mxu0
            %v581 = vadd.f32 0.0, %v580
            %582 = vmatmul.bf16.gmra.mxu0 %v482
            %v583 = vpop.f32.mrf.mxu0
            %v584 = vadd.f32 0.0, %v583
            %v585 = vpop.f32.mrf.mxu0
            %v586 = vadd.f32 0.0, %v585
            %587 = vmatmul.bf16.gmra.mxu0 %v483
            %v588 = vpop.f32.mrf.mxu0
            %v589 = vadd.f32 0.0, %v588
            %v590 = vpop.f32.mrf.mxu0
            %v591 = vadd.f32 0.0, %v590
            %592 = vmatmul.bf16.gmra.mxu0 %v484
            %v593 = vpop.f32.mrf.mxu0
            %v594 = vadd.f32 0.0, %v593
            %v595 = vpop.f32.mrf.mxu0
            %v596 = vadd.f32 0.0, %v595
            %597 = vmatmul.bf16.gmra.mxu0 %v485
            %v598 = vpop.f32.mrf.mxu0
            %v599 = vadd.f32 0.0, %v598
            %v600 = vpop.f32.mrf.mxu0
            %v601 = vadd.f32 0.0, %v600
            %602 = vmatmul.bf16.gmra.mxu0 %v486
            %v603 = vpop.f32.mrf.mxu0
            %v604 = vadd.f32 0.0, %v603
            %v605 = vpop.f32.mrf.mxu0
            %v606 = vadd.f32 0.0, %v605
            %607 = vmatmul.bf16.gmra.mxu0 %v487
            %v608 = vpop.f32.mrf.mxu0
            %v609 = vadd.f32 0.0, %v608
            %v610 = vpop.f32.mrf.mxu0
            %v611 = vadd.f32 0.0, %v610
            %612 = vmatmul.bf16.gmra.mxu0 %v488
            %v613 = vpop.f32.mrf.mxu0
            %v614 = vadd.f32 0.0, %v613
            %v615 = vpop.f32.mrf.mxu0
            %v616 = vadd.f32 0.0, %v615
            %617 = vmatmul.bf16.gmra.mxu0 %v489
            %v618 = vpop.f32.mrf.mxu0
            %v619 = vadd.f32 0.0, %v618
            %v620 = vpop.f32.mrf.mxu0
            %v621 = vadd.f32 0.0, %v620
            %622 = vmatmul.bf16.gmra.mxu0 %v490
            %v623 = vpop.f32.mrf.mxu0
            %v624 = vadd.f32 0.0, %v623
            %v625 = vpop.f32.mrf.mxu0
            %v626 = vadd.f32 0.0, %v625
            %627 = vmatmul.bf16.gmra.mxu0 %v491
            %v628 = vpop.f32.mrf.mxu0
            %v629 = vadd.f32 0.0, %v628
            %v630 = vpop.f32.mrf.mxu0
            %v631 = vadd.f32 0.0, %v630
            %632 = vmatmul.bf16.gmra.mxu0 %v492
            %v633 = vpop.f32.mrf.mxu0
            %v634 = vadd.f32 0.0, %v633
            %v635 = vpop.f32.mrf.mxu0
            %v636 = vadd.f32 0.0, %v635
            %637 = vmatmul.bf16.gmra.mxu0 %v493
            %v638 = vpop.f32.mrf.mxu0
            %v639 = vadd.f32 0.0, %v638
            %v640 = vpop.f32.mrf.mxu0
            %v641 = vadd.f32 0.0, %v640
            %642 = vmatmul.bf16.gmra.mxu0 %v494
            %v643 = vpop.f32.mrf.mxu0
            %v644 = vadd.f32 0.0, %v643
            %v645 = vpop.f32.mrf.mxu0
            %v646 = vadd.f32 0.0, %v645
            %647 = vdwg.mxu0
            %v648 = vpack.c.bf16 %v569, %v569
            %v649 = vpack.c.bf16 %v571, %v571
            %v650 = vpack.c.bf16 %v574, %v574
            %v651 = vpack.c.bf16 %v576, %v576
            %v652 = vpack.c.bf16 %v579, %v579
            %v653 = vpack.c.bf16 %v581, %v581
            %v654 = vpack.c.bf16 %v584, %v584
            %v655 = vpack.c.bf16 %v586, %v586
            %v656 = vpack.c.bf16 %v589, %v589
            %v657 = vpack.c.bf16 %v591, %v591
            %v658 = vpack.c.bf16 %v594, %v594
            %v659 = vpack.c.bf16 %v596, %v596
            %v660 = vpack.c.bf16 %v599, %v599
            %v661 = vpack.c.bf16 %v601, %v601
            %v662 = vpack.c.bf16 %v604, %v604
            %v663 = vpack.c.bf16 %v606, %v606
            %v664 = vpack.c.bf16 %v609, %v609
            %v665 = vpack.c.bf16 %v611, %v611
            %v666 = vpack.c.bf16 %v614, %v614
            %v667 = vpack.c.bf16 %v616, %v616
            %v668 = vpack.c.bf16 %v619, %v619
            %v669 = vpack.c.bf16 %v621, %v621
            %v670 = vpack.c.bf16 %v624, %v624
            %v671 = vpack.c.bf16 %v626, %v626
            %v672 = vpack.c.bf16 %v629, %v629
            %v673 = vpack.c.bf16 %v631, %v631
            %v674 = vpack.c.bf16 %v634, %v634
            %v675 = vpack.c.bf16 %v636, %v636
            %v676 = vpack.c.bf16 %v639, %v639
            %v677 = vpack.c.bf16 %v641, %v641
            %v678 = vpack.c.bf16 %v644, %v644
            %v679 = vpack.c.bf16 %v646, %v646
            %680 = vst [vmem:[#allocation3] sm:$0xf] %v648
            %681 = vst [vmem:[#allocation3 + $0x4] sm:$0xf] %v649
            %682 = vst [vmem:[#allocation3 + $0x8] sm:$0xf] %v650
            %683 = vst [vmem:[#allocation3 + $0xc] sm:$0xf] %v651
            %684 = vst [vmem:[#allocation3 + $0x10] sm:$0xf] %v652
            %685 = vst [vmem:[#allocation3 + $0x14] sm:$0xf] %v653
            %686 = vst [vmem:[#allocation3 + $0x18] sm:$0xf] %v654
            %687 = vst [vmem:[#allocation3 + $0x1c] sm:$0xf] %v655
            %688 = vst [vmem:[#allocation3 + $0x20] sm:$0xf] %v656
            %689 = vst [vmem:[#allocation3 + $0x24] sm:$0xf] %v657
            %690 = vst [vmem:[#allocation3 + $0x28] sm:$0xf] %v658
            %691 = vst [vmem:[#allocation3 + $0x2c] sm:$0xf] %v659
            %692 = vst [vmem:[#allocation3 + $0x30] sm:$0xf] %v660
            %693 = vst [vmem:[#allocation3 + $0x34] sm:$0xf] %v661
            %694 = vst [vmem:[#allocation3 + $0x38] sm:$0xf] %v662
            %695 = vst [vmem:[#allocation3 + $0x3c] sm:$0xf] %v663
            %696 = vst [vmem:[#allocation3 + $0x40] sm:$0xf] %v664
            %697 = vst [vmem:[#allocation3 + $0x44] sm:$0xf] %v665
            %698 = vst [vmem:[#allocation3 + $0x48] sm:$0xf] %v666
            %699 = vst [vmem:[#allocation3 + $0x4c] sm:$0xf] %v667
            %700 = vst [vmem:[#allocation3 + $0x50] sm:$0xf] %v668
            %701 = vst [vmem:[#allocation3 + $0x54] sm:$0xf] %v669
            %702 = vst [vmem:[#allocation3 + $0x58] sm:$0xf] %v670
            %703 = vst [vmem:[#allocation3 + $0x5c] sm:$0xf] %v671
            %704 = vst [vmem:[#allocation3 + $0x60] sm:$0xf] %v672
            %705 = vst [vmem:[#allocation3 + $0x64] sm:$0xf] %v673
            %706 = vst [vmem:[#allocation3 + $0x68] sm:$0xf] %v674
            %707 = vst [vmem:[#allocation3 + $0x6c] sm:$0xf] %v675
            %708 = vst [vmem:[#allocation3 + $0x70] sm:$0xf] %v676
            %709 = vst [vmem:[#allocation3 + $0x74] sm:$0xf] %v677
            %710 = vst [vmem:[#allocation3 + $0x78] sm:$0xf] %v678
            %711 = vst [vmem:[#allocation3 + $0x7c] sm:$0xf] %v679
          $region64: #{tpu_custom_call.1} parent=59 // pred_fallthru
            _
          %p712 = scmp.ne.s32.totalorder %s25, 0
          // Predicated region
          $region65: #{tpu_custom_call.1} parent=59 // pred_check
            %p713 = pneg %p712
          $region66: #{tpu_custom_call.1} parent=59 // pred_check_branch
            %715 = sbr.rel (%p713) target = $region68
          $region67: #{tpu_custom_call.1} parent=59 // pred_region
            %v716 = vld [vmem:[#allocation2] sm:$0xf]
            %v717 = vld [vmem:[#allocation2 + $0x4] sm:$0xf]
            %v718 = vld [vmem:[#allocation2 + $0x8] sm:$0xf]
            %v719 = vld [vmem:[#allocation2 + $0xc] sm:$0xf]
            %v720 = vld [vmem:[#allocation2 + $0x10] sm:$0xf]
            %v721 = vld [vmem:[#allocation2 + $0x14] sm:$0xf]
            %v722 = vld [vmem:[#allocation2 + $0x18] sm:$0xf]
            %v723 = vld [vmem:[#allocation2 + $0x1c] sm:$0xf]
            %v724 = vld [vmem:[#allocation2 + $0x20] sm:$0xf]
            %v725 = vld [vmem:[#allocation2 + $0x24] sm:$0xf]
            %v726 = vld [vmem:[#allocation2 + $0x28] sm:$0xf]
            %v727 = vld [vmem:[#allocation2 + $0x2c] sm:$0xf]
            %v728 = vld [vmem:[#allocation2 + $0x30] sm:$0xf]
            %v729 = vld [vmem:[#allocation2 + $0x34] sm:$0xf]
            %v730 = vld [vmem:[#allocation2 + $0x38] sm:$0xf]
            %v731 = vld [vmem:[#allocation2 + $0x3c] sm:$0xf]
            %v732 = vld [vmem:[#allocation2 + $0x40] sm:$0xf]
            %v733 = vld [vmem:[#allocation2 + $0x44] sm:$0xf]
            %v734 = vld [vmem:[#allocation2 + $0x48] sm:$0xf]
            %v735 = vld [vmem:[#allocation2 + $0x4c] sm:$0xf]
            %v736 = vld [vmem:[#allocation2 + $0x50] sm:$0xf]
            %v737 = vld [vmem:[#allocation2 + $0x54] sm:$0xf]
            %v738 = vld [vmem:[#allocation2 + $0x58] sm:$0xf]
            %v739 = vld [vmem:[#allocation2 + $0x5c] sm:$0xf]
            %v740 = vld [vmem:[#allocation2 + $0x60] sm:$0xf]
            %v741 = vld [vmem:[#allocation2 + $0x64] sm:$0xf]
            %v742 = vld [vmem:[#allocation2 + $0x68] sm:$0xf]
            %v743 = vld [vmem:[#allocation2 + $0x6c] sm:$0xf]
            %v744 = vld [vmem:[#allocation2 + $0x70] sm:$0xf]
            %v745 = vld [vmem:[#allocation2 + $0x74] sm:$0xf]
            %v746 = vld [vmem:[#allocation2 + $0x78] sm:$0xf]
            %v747 = vld [vmem:[#allocation2 + $0x7c] sm:$0xf]
            %v748 = vld [vmem:[%s310] sm:$0xf]
            %v749 = vld [vmem:[%s310 + $0x4] sm:$0xf]
            %v750 = vld [vmem:[%s310 + $0x8] sm:$0xf]
            %v751 = vld [vmem:[%s310 + $0xc] sm:$0xf]
            %v752 = vld [vmem:[%s310 + $0x10] sm:$0xf]
            %v753 = vld [vmem:[%s310 + $0x14] sm:$0xf]
            %v754 = vld [vmem:[%s310 + $0x18] sm:$0xf]
            %v755 = vld [vmem:[%s310 + $0x1c] sm:$0xf]
            %v756 = vld [vmem:[%s310 + $0x20] sm:$0xf]
            %v757 = vld [vmem:[%s310 + $0x24] sm:$0xf]
            %v758 = vld [vmem:[%s310 + $0x28] sm:$0xf]
            %v759 = vld [vmem:[%s310 + $0x2c] sm:$0xf]
            %v760 = vld [vmem:[%s310 + $0x30] sm:$0xf]
            %v761 = vld [vmem:[%s310 + $0x34] sm:$0xf]
            %v762 = vld [vmem:[%s310 + $0x38] sm:$0xf]
            %v763 = vld [vmem:[%s310 + $0x3c] sm:$0xf]
            %v796 = vunpack.c.l.b16 %v716
            %v797 = vunpack.c.l.b16 %v717
            %v798 = vunpack.c.l.b16 %v718
            %v799 = vunpack.c.l.b16 %v719
            %v800 = vunpack.c.l.b16 %v720
            %v801 = vunpack.c.l.b16 %v721
            %v802 = vunpack.c.l.b16 %v722
            %v803 = vunpack.c.l.b16 %v723
            %v804 = vunpack.c.l.b16 %v724
            %v805 = vunpack.c.l.b16 %v725
            %v806 = vunpack.c.l.b16 %v726
            %v807 = vunpack.c.l.b16 %v727
            %v808 = vunpack.c.l.b16 %v728
            %v809 = vunpack.c.l.b16 %v729
            %v810 = vunpack.c.l.b16 %v730
            %v811 = vunpack.c.l.b16 %v731
            %v812 = vunpack.c.l.b16 %v732
            %v813 = vunpack.c.l.b16 %v733
            %v814 = vunpack.c.l.b16 %v734
            %v815 = vunpack.c.l.b16 %v735
            %v816 = vunpack.c.l.b16 %v736
            %v817 = vunpack.c.l.b16 %v737
            %v818 = vunpack.c.l.b16 %v738
            %v819 = vunpack.c.l.b16 %v739
            %v820 = vunpack.c.l.b16 %v740
            %v821 = vunpack.c.l.b16 %v741
            %v822 = vunpack.c.l.b16 %v742
            %v823 = vunpack.c.l.b16 %v743
            %v824 = vunpack.c.l.b16 %v744
            %v825 = vunpack.c.l.b16 %v745
            %v826 = vunpack.c.l.b16 %v746
            %v827 = vunpack.c.l.b16 %v747
            %v828 = vpack.c.b16 %v797, %v796
            %v829 = vpack.c.b16 %v799, %v798
            %v830 = vpack.c.b16 %v801, %v800
            %v831 = vpack.c.b16 %v803, %v802
            %v832 = vpack.c.b16 %v805, %v804
            %v833 = vpack.c.b16 %v807, %v806
            %v834 = vpack.c.b16 %v809, %v808
            %v835 = vpack.c.b16 %v811, %v810
            %v836 = vpack.c.b16 %v813, %v812
            %v837 = vpack.c.b16 %v815, %v814
            %v838 = vpack.c.b16 %v817, %v816
            %v839 = vpack.c.b16 %v819, %v818
            %v840 = vpack.c.b16 %v821, %v820
            %v841 = vpack.c.b16 %v823, %v822
            %v842 = vpack.c.b16 %v825, %v824
            %v843 = vpack.c.b16 %v827, %v826
            %v876 = vunpack.c.l.b16 %v748
            %v877 = vunpack.c.l.b16 %v749
            %v878 = vunpack.c.l.b16 %v750
            %v879 = vunpack.c.l.b16 %v751
            %v880 = vunpack.c.l.b16 %v752
            %v881 = vunpack.c.l.b16 %v753
            %v882 = vunpack.c.l.b16 %v754
            %v883 = vunpack.c.l.b16 %v755
            %v884 = vunpack.c.l.b16 %v756
            %v885 = vunpack.c.l.b16 %v757
            %v886 = vunpack.c.l.b16 %v758
            %v887 = vunpack.c.l.b16 %v759
            %v888 = vunpack.c.l.b16 %v760
            %v889 = vunpack.c.l.b16 %v761
            %v890 = vunpack.c.l.b16 %v762
            %v891 = vunpack.c.l.b16 %v763
            %v892 = vpack.c.b16 %v877, %v876
            %v893 = vpack.c.b16 %v879, %v878
            %v894 = vpack.c.b16 %v881, %v880
            %v895 = vpack.c.b16 %v883, %v882
            %v896 = vpack.c.b16 %v885, %v884
            %v897 = vpack.c.b16 %v887, %v886
            %v898 = vpack.c.b16 %v889, %v888
            %v899 = vpack.c.b16 %v891, %v890
            %908 = vmatpush.bf16.msra.mxu0 %v899
            %909 = vmatpush.bf16.msra.mxu0 %v898
            %910 = vmatpush.bf16.msra.mxu0 %v897
            %911 = vmatpush.bf16.msra.mxu0 %v896
            %912 = vmatpush.bf16.msra.mxu0 %v895
            %913 = vmatpush.bf16.msra.mxu0 %v894
            %914 = vmatpush.bf16.msra.mxu0 %v893
            %915 = vmatpush.bf16.msra.mxu0 %v892
            %916 = vmatmul.bf16.gmra.mxu0 %v828
            %v917 = vpop.f32.mrf.mxu0
            %v918 = vadd.f32 0.0, %v917
            %v919 = vpop.f32.mrf.mxu0
            %v920 = vadd.f32 0.0, %v919
            %921 = vmatmul.bf16.gmra.mxu0 %v829
            %v922 = vpop.f32.mrf.mxu0
            %v923 = vadd.f32 0.0, %v922
            %v924 = vpop.f32.mrf.mxu0
            %v925 = vadd.f32 0.0, %v924
            %926 = vmatmul.bf16.gmra.mxu0 %v830
            %v927 = vpop.f32.mrf.mxu0
            %v928 = vadd.f32 0.0, %v927
            %v929 = vpop.f32.mrf.mxu0
            %v930 = vadd.f32 0.0, %v929
            %931 = vmatmul.bf16.gmra.mxu0 %v831
            %v932 = vpop.f32.mrf.mxu0
            %v933 = vadd.f32 0.0, %v932
            %v934 = vpop.f32.mrf.mxu0
            %v935 = vadd.f32 0.0, %v934
            %936 = vmatmul.bf16.gmra.mxu0 %v832
            %v937 = vpop.f32.mrf.mxu0
            %v938 = vadd.f32 0.0, %v937
            %v939 = vpop.f32.mrf.mxu0
            %v940 = vadd.f32 0.0, %v939
            %941 = vmatmul.bf16.gmra.mxu0 %v833
            %v942 = vpop.f32.mrf.mxu0
            %v943 = vadd.f32 0.0, %v942
            %v944 = vpop.f32.mrf.mxu0
            %v945 = vadd.f32 0.0, %v944
            %946 = vmatmul.bf16.gmra.mxu0 %v834
            %v947 = vpop.f32.mrf.mxu0
            %v948 = vadd.f32 0.0, %v947
            %v949 = vpop.f32.mrf.mxu0
            %v950 = vadd.f32 0.0, %v949
            %951 = vmatmul.bf16.gmra.mxu0 %v835
            %v952 = vpop.f32.mrf.mxu0
            %v953 = vadd.f32 0.0, %v952
            %v954 = vpop.f32.mrf.mxu0
            %v955 = vadd.f32 0.0, %v954
            %956 = vmatmul.bf16.gmra.mxu0 %v836
            %v957 = vpop.f32.mrf.mxu0
            %v958 = vadd.f32 0.0, %v957
            %v959 = vpop.f32.mrf.mxu0
            %v960 = vadd.f32 0.0, %v959
            %961 = vmatmul.bf16.gmra.mxu0 %v837
            %v962 = vpop.f32.mrf.mxu0
            %v963 = vadd.f32 0.0, %v962
            %v964 = vpop.f32.mrf.mxu0
            %v965 = vadd.f32 0.0, %v964
            %966 = vmatmul.bf16.gmra.mxu0 %v838
            %v967 = vpop.f32.mrf.mxu0
            %v968 = vadd.f32 0.0, %v967
            %v969 = vpop.f32.mrf.mxu0
            %v970 = vadd.f32 0.0, %v969
            %971 = vmatmul.bf16.gmra.mxu0 %v839
            %v972 = vpop.f32.mrf.mxu0
            %v973 = vadd.f32 0.0, %v972
            %v974 = vpop.f32.mrf.mxu0
            %v975 = vadd.f32 0.0, %v974
            %976 = vmatmul.bf16.gmra.mxu0 %v840
            %v977 = vpop.f32.mrf.mxu0
            %v978 = vadd.f32 0.0, %v977
            %v979 = vpop.f32.mrf.mxu0
            %v980 = vadd.f32 0.0, %v979
            %981 = vmatmul.bf16.gmra.mxu0 %v841
            %v982 = vpop.f32.mrf.mxu0
            %v983 = vadd.f32 0.0, %v982
            %v984 = vpop.f32.mrf.mxu0
            %v985 = vadd.f32 0.0, %v984
            %986 = vmatmul.bf16.gmra.mxu0 %v842
            %v987 = vpop.f32.mrf.mxu0
            %v988 = vadd.f32 0.0, %v987
            %v989 = vpop.f32.mrf.mxu0
            %v990 = vadd.f32 0.0, %v989
            %991 = vmatmul.bf16.gmra.mxu0 %v843
            %v992 = vpop.f32.mrf.mxu0
            %v993 = vadd.f32 0.0, %v992
            %v994 = vpop.f32.mrf.mxu0
            %v995 = vadd.f32 0.0, %v994
            %996 = vdwg.mxu0
            %v997 = vpack.c.bf16 %v918, %v918
            %v998 = vpack.c.bf16 %v920, %v920
            %v999 = vpack.c.bf16 %v923, %v923
            %v1000 = vpack.c.bf16 %v925, %v925
            %v1001 = vpack.c.bf16 %v928, %v928
            %v1002 = vpack.c.bf16 %v930, %v930
            %v1003 = vpack.c.bf16 %v933, %v933
            %v1004 = vpack.c.bf16 %v935, %v935
            %v1005 = vpack.c.bf16 %v938, %v938
            %v1006 = vpack.c.bf16 %v940, %v940
            %v1007 = vpack.c.bf16 %v943, %v943
            %v1008 = vpack.c.bf16 %v945, %v945
            %v1009 = vpack.c.bf16 %v948, %v948
            %v1010 = vpack.c.bf16 %v950, %v950
            %v1011 = vpack.c.bf16 %v953, %v953
            %v1012 = vpack.c.bf16 %v955, %v955
            %v1013 = vpack.c.bf16 %v958, %v958
            %v1014 = vpack.c.bf16 %v960, %v960
            %v1015 = vpack.c.bf16 %v963, %v963
            %v1016 = vpack.c.bf16 %v965, %v965
            %v1017 = vpack.c.bf16 %v968, %v968
            %v1018 = vpack.c.bf16 %v970, %v970
            %v1019 = vpack.c.bf16 %v973, %v973
            %v1020 = vpack.c.bf16 %v975, %v975
            %v1021 = vpack.c.bf16 %v978, %v978
            %v1022 = vpack.c.bf16 %v980, %v980
            %v1023 = vpack.c.bf16 %v983, %v983
            %v1024 = vpack.c.bf16 %v985, %v985
            %v1025 = vpack.c.bf16 %v988, %v988
            %v1026 = vpack.c.bf16 %v990, %v990
            %v1027 = vpack.c.bf16 %v993, %v993
            %v1028 = vpack.c.bf16 %v995, %v995
            %1029 = vst [vmem:[#allocation3] sm:$0xf] %v997
            %1030 = vst [vmem:[#allocation3 + $0x4] sm:$0xf] %v998
            %1031 = vst [vmem:[#allocation3 + $0x8] sm:$0xf] %v999
            %1032 = vst [vmem:[#allocation3 + $0xc] sm:$0xf] %v1000
            %1033 = vst [vmem:[#allocation3 + $0x10] sm:$0xf] %v1001
            %1034 = vst [vmem:[#allocation3 + $0x14] sm:$0xf] %v1002
            %1035 = vst [vmem:[#allocation3 + $0x18] sm:$0xf] %v1003
            %1036 = vst [vmem:[#allocation3 + $0x1c] sm:$0xf] %v1004
            %1037 = vst [vmem:[#allocation3 + $0x20] sm:$0xf] %v1005
            %1038 = vst [vmem:[#allocation3 + $0x24] sm:$0xf] %v1006
            %1039 = vst [vmem:[#allocation3 + $0x28] sm:$0xf] %v1007
            %1040 = vst [vmem:[#allocation3 + $0x2c] sm:$0xf] %v1008
            %1041 = vst [vmem:[#allocation3 + $0x30] sm:$0xf] %v1009
            %1042 = vst [vmem:[#allocation3 + $0x34] sm:$0xf] %v1010
            %1043 = vst [vmem:[#allocation3 + $0x38] sm:$0xf] %v1011
            %1044 = vst [vmem:[#allocation3 + $0x3c] sm:$0xf] %v1012
            %1045 = vst [vmem:[#allocation3 + $0x40] sm:$0xf] %v1013
            %1046 = vst [vmem:[#allocation3 + $0x44] sm:$0xf] %v1014
            %1047 = vst [vmem:[#allocation3 + $0x48] sm:$0xf] %v1015
            %1048 = vst [vmem:[#allocation3 + $0x4c] sm:$0xf] %v1016
            %1049 = vst [vmem:[#allocation3 + $0x50] sm:$0xf] %v1017
            %1050 = vst [vmem:[#allocation3 + $0x54] sm:$0xf] %v1018
            %1051 = vst [vmem:[#allocation3 + $0x58] sm:$0xf] %v1019
            %1052 = vst [vmem:[#allocation3 + $0x5c] sm:$0xf] %v1020
            %1053 = vst [vmem:[#allocation3 + $0x60] sm:$0xf] %v1021
            %1054 = vst [vmem:[#allocation3 + $0x64] sm:$0xf] %v1022
            %1055 = vst [vmem:[#allocation3 + $0x68] sm:$0xf] %v1023
            %1056 = vst [vmem:[#allocation3 + $0x6c] sm:$0xf] %v1024
            %1057 = vst [vmem:[#allocation3 + $0x70] sm:$0xf] %v1025
            %1058 = vst [vmem:[#allocation3 + $0x74] sm:$0xf] %v1026
            %1059 = vst [vmem:[#allocation3 + $0x78] sm:$0xf] %v1027
            %1060 = vst [vmem:[#allocation3 + $0x7c] sm:$0xf] %v1028
          $region68: #{tpu_custom_call.1} parent=59 // pred_fallthru
            _
        $region60: #{tpu_custom_call.1} parent=39 // pred_fallthru
          _
        %v1061 = vld [vmem:[%s295] sm:$0xff]
        %v1062 = vld [vmem:[%s295 + $0x8] sm:$0xff]
        %v1063 = vld [vmem:[%s295 + $0x10] sm:$0xff]
        %v1064 = vld [vmem:[%s295 + $0x18] sm:$0xff]
        %v1065 = vld [vmem:[%s295 + $0x20] sm:$0xff]
        %v1066 = vld [vmem:[%s295 + $0x28] sm:$0xff]
        %v1067 = vld [vmem:[%s295 + $0x30] sm:$0xff]
        %v1068 = vld [vmem:[%s295 + $0x38] sm:$0xff]
        %v1069 = vld [vmem:[%s295 + $0x40] sm:$0xff]
        %v1070 = vld [vmem:[%s295 + $0x48] sm:$0xff]
        %v1071 = vld [vmem:[%s295 + $0x50] sm:$0xff]
        %v1072 = vld [vmem:[%s295 + $0x58] sm:$0xff]
        %v1073 = vld [vmem:[%s295 + $0x60] sm:$0xff]
        %v1074 = vld [vmem:[%s295 + $0x68] sm:$0xff]
        %v1075 = vld [vmem:[%s295 + $0x70] sm:$0xff]
        %v1076 = vld [vmem:[%s295 + $0x78] sm:$0xff]
        %v1077 = vunpack.c.0.s8 %v1061
        %v1078 = vunpack.c.0.s8 %v1062
        %v1079 = vunpack.c.1.s8 %v1061
        %v1080 = vunpack.c.1.s8 %v1062
        %v1081 = vunpack.c.2.s8 %v1061
        %v1082 = vunpack.c.2.s8 %v1062
        %v1083 = vunpack.c.3.s8 %v1061
        %v1084 = vunpack.c.3.s8 %v1062
        %v1085 = vunpack.c.0.s8 %v1063
        %v1086 = vunpack.c.0.s8 %v1064
        %v1087 = vunpack.c.1.s8 %v1063
        %v1088 = vunpack.c.1.s8 %v1064
        %v1089 = vunpack.c.2.s8 %v1063
        %v1090 = vunpack.c.2.s8 %v1064
        %v1091 = vunpack.c.3.s8 %v1063
        %v1092 = vunpack.c.3.s8 %v1064
        %v1093 = vunpack.c.0.s8 %v1065
        %v1094 = vunpack.c.0.s8 %v1066
        %v1095 = vunpack.c.1.s8 %v1065
        %v1096 = vunpack.c.1.s8 %v1066
        %v1097 = vunpack.c.2.s8 %v1065
        %v1098 = vunpack.c.2.s8 %v1066
        %v1099 = vunpack.c.3.s8 %v1065
        %v1100 = vunpack.c.3.s8 %v1066
        %v1101 = vunpack.c.0.s8 %v1067
        %v1102 = vunpack.c.0.s8 %v1068
        %v1103 = vunpack.c.1.s8 %v1067
        %v1104 = vunpack.c.1.s8 %v1068
        %v1105 = vunpack.c.2.s8 %v1067
        %v1106 = vunpack.c.2.s8 %v1068
        %v1107 = vunpack.c.3.s8 %v1067
        %v1108 = vunpack.c.3.s8 %v1068
        %v1109 = vunpack.c.0.s8 %v1069
        %v1110 = vunpack.c.0.s8 %v1070
        %v1111 = vunpack.c.1.s8 %v1069
        %v1112 = vunpack.c.1.s8 %v1070
        %v1113 = vunpack.c.2.s8 %v1069
        %v1114 = vunpack.c.2.s8 %v1070
        %v1115 = vunpack.c.3.s8 %v1069
        %v1116 = vunpack.c.3.s8 %v1070
        %v1117 = vunpack.c.0.s8 %v1071
        %v1118 = vunpack.c.0.s8 %v1072
        %v1119 = vunpack.c.1.s8 %v1071
        %v1120 = vunpack.c.1.s8 %v1072
        %v1121 = vunpack.c.2.s8 %v1071
        %v1122 = vunpack.c.2.s8 %v1072
        %v1123 = vunpack.c.3.s8 %v1071
        %v1124 = vunpack.c.3.s8 %v1072
        %v1125 = vunpack.c.0.s8 %v1073
        %v1126 = vunpack.c.0.s8 %v1074
        %v1127 = vunpack.c.1.s8 %v1073
        %v1128 = vunpack.c.1.s8 %v1074
        %v1129 = vunpack.c.2.s8 %v1073
        %v1130 = vunpack.c.2.s8 %v1074
        %v1131 = vunpack.c.3.s8 %v1073
        %v1132 = vunpack.c.3.s8 %v1074
        %v1133 = vunpack.c.0.s8 %v1075
        %v1134 = vunpack.c.0.s8 %v1076
        %v1135 = vunpack.c.1.s8 %v1075
        %v1136 = vunpack.c.1.s8 %v1076
        %v1137 = vunpack.c.2.s8 %v1075
        %v1138 = vunpack.c.2.s8 %v1076
        %v1139 = vunpack.c.3.s8 %v1075
        %v1140 = vunpack.c.3.s8 %v1076
        %v1141 = vcvt.s32.f32 %v1077
        %v1142 = vcvt.s32.f32 %v1078
        %v1143 = vcvt.s32.f32 %v1079
        %v1144 = vcvt.s32.f32 %v1080
        %v1145 = vcvt.s32.f32 %v1081
        %v1146 = vcvt.s32.f32 %v1082
        %v1147 = vcvt.s32.f32 %v1083
        %v1148 = vcvt.s32.f32 %v1084
        %v1149 = vcvt.s32.f32 %v1085
        %v1150 = vcvt.s32.f32 %v1086
        %v1151 = vcvt.s32.f32 %v1087
        %v1152 = vcvt.s32.f32 %v1088
        %v1153 = vcvt.s32.f32 %v1089
        %v1154 = vcvt.s32.f32 %v1090
        %v1155 = vcvt.s32.f32 %v1091
        %v1156 = vcvt.s32.f32 %v1092
        %v1157 = vcvt.s32.f32 %v1093
        %v1158 = vcvt.s32.f32 %v1094
        %v1159 = vcvt.s32.f32 %v1095
        %v1160 = vcvt.s32.f32 %v1096
        %v1161 = vcvt.s32.f32 %v1097
        %v1162 = vcvt.s32.f32 %v1098
        %v1163 = vcvt.s32.f32 %v1099
        %v1164 = vcvt.s32.f32 %v1100
        %v1165 = vcvt.s32.f32 %v1101
        %v1166 = vcvt.s32.f32 %v1102
        %v1167 = vcvt.s32.f32 %v1103
        %v1168 = vcvt.s32.f32 %v1104
        %v1169 = vcvt.s32.f32 %v1105
        %v1170 = vcvt.s32.f32 %v1106
        %v1171 = vcvt.s32.f32 %v1107
        %v1172 = vcvt.s32.f32 %v1108
        %v1173 = vcvt.s32.f32 %v1109
        %v1174 = vcvt.s32.f32 %v1110
        %v1175 = vcvt.s32.f32 %v1111
        %v1176 = vcvt.s32.f32 %v1112
        %v1177 = vcvt.s32.f32 %v1113
        %v1178 = vcvt.s32.f32 %v1114
        %v1179 = vcvt.s32.f32 %v1115
        %v1180 = vcvt.s32.f32 %v1116
        %v1181 = vcvt.s32.f32 %v1117
        %v1182 = vcvt.s32.f32 %v1118
        %v1183 = vcvt.s32.f32 %v1119
        %v1184 = vcvt.s32.f32 %v1120
        %v1185 = vcvt.s32.f32 %v1121
        %v1186 = vcvt.s32.f32 %v1122
        %v1187 = vcvt.s32.f32 %v1123
        %v1188 = vcvt.s32.f32 %v1124
        %v1189 = vcvt.s32.f32 %v1125
        %v1190 = vcvt.s32.f32 %v1126
        %v1191 = vcvt.s32.f32 %v1127
        %v1192 = vcvt.s32.f32 %v1128
        %v1193 = vcvt.s32.f32 %v1129
        %v1194 = vcvt.s32.f32 %v1130
        %v1195 = vcvt.s32.f32 %v1131
        %v1196 = vcvt.s32.f32 %v1132
        %v1197 = vcvt.s32.f32 %v1133
        %v1198 = vcvt.s32.f32 %v1134
        %v1199 = vcvt.s32.f32 %v1135
        %v1200 = vcvt.s32.f32 %v1136
        %v1201 = vcvt.s32.f32 %v1137
        %v1202 = vcvt.s32.f32 %v1138
        %v1203 = vcvt.s32.f32 %v1139
        %v1204 = vcvt.s32.f32 %v1140
        %v1205 = vpack.c.bf16 %v1143, %v1141
        %v1206 = vpack.c.bf16 %v1144, %v1142
        %v1207 = vpack.c.bf16 %v1147, %v1145
        %v1208 = vpack.c.bf16 %v1148, %v1146
        %v1209 = vpack.c.bf16 %v1151, %v1149
        %v1210 = vpack.c.bf16 %v1152, %v1150
        %v1211 = vpack.c.bf16 %v1155, %v1153
        %v1212 = vpack.c.bf16 %v1156, %v1154
        %v1213 = vpack.c.bf16 %v1159, %v1157
        %v1214 = vpack.c.bf16 %v1160, %v1158
        %v1215 = vpack.c.bf16 %v1163, %v1161
        %v1216 = vpack.c.bf16 %v1164, %v1162
        %v1217 = vpack.c.bf16 %v1167, %v1165
        %v1218 = vpack.c.bf16 %v1168, %v1166
        %v1219 = vpack.c.bf16 %v1171, %v1169
        %v1220 = vpack.c.bf16 %v1172, %v1170
        %v1221 = vpack.c.bf16 %v1175, %v1173
        %v1222 = vpack.c.bf16 %v1176, %v1174
        %v1223 = vpack.c.bf16 %v1179, %v1177
        %v1224 = vpack.c.bf16 %v1180, %v1178
        %v1225 = vpack.c.bf16 %v1183, %v1181
        %v1226 = vpack.c.bf16 %v1184, %v1182
        %v1227 = vpack.c.bf16 %v1187, %v1185
        %v1228 = vpack.c.bf16 %v1188, %v1186
        %v1229 = vpack.c.bf16 %v1191, %v1189
        %v1230 = vpack.c.bf16 %v1192, %v1190
        %v1231 = vpack.c.bf16 %v1195, %v1193
        %v1232 = vpack.c.bf16 %v1196, %v1194
        %v1233 = vpack.c.bf16 %v1199, %v1197
        %v1234 = vpack.c.bf16 %v1200, %v1198
        %v1235 = vpack.c.bf16 %v1203, %v1201
        %v1236 = vpack.c.bf16 %v1204, %v1202
        %v1237 = vld [vmem:[#allocation3] sm:$0xf]
        %v1238 = vld [vmem:[#allocation3 + $0x4] sm:$0xf]
        %v1239 = vld [vmem:[#allocation3 + $0x8] sm:$0xf]
        %v1240 = vld [vmem:[#allocation3 + $0xc] sm:$0xf]
        %v1241 = vld [vmem:[#allocation3 + $0x10] sm:$0xf]
        %v1242 = vld [vmem:[#allocation3 + $0x14] sm:$0xf]
        %v1243 = vld [vmem:[#allocation3 + $0x18] sm:$0xf]
        %v1244 = vld [vmem:[#allocation3 + $0x1c] sm:$0xf]
        %v1245 = vld [vmem:[#allocation3 + $0x20] sm:$0xf]
        %v1246 = vld [vmem:[#allocation3 + $0x24] sm:$0xf]
        %v1247 = vld [vmem:[#allocation3 + $0x28] sm:$0xf]
        %v1248 = vld [vmem:[#allocation3 + $0x2c] sm:$0xf]
        %v1249 = vld [vmem:[#allocation3 + $0x30] sm:$0xf]
        %v1250 = vld [vmem:[#allocation3 + $0x34] sm:$0xf]
        %v1251 = vld [vmem:[#allocation3 + $0x38] sm:$0xf]
        %v1252 = vld [vmem:[#allocation3 + $0x3c] sm:$0xf]
        %v1253 = vld [vmem:[#allocation3 + $0x40] sm:$0xf]
        %v1254 = vld [vmem:[#allocation3 + $0x44] sm:$0xf]
        %v1255 = vld [vmem:[#allocation3 + $0x48] sm:$0xf]
        %v1256 = vld [vmem:[#allocation3 + $0x4c] sm:$0xf]
        %v1257 = vld [vmem:[#allocation3 + $0x50] sm:$0xf]
        %v1258 = vld [vmem:[#allocation3 + $0x54] sm:$0xf]
        %v1259 = vld [vmem:[#allocation3 + $0x58] sm:$0xf]
        %v1260 = vld [vmem:[#allocation3 + $0x5c] sm:$0xf]
        %v1261 = vld [vmem:[#allocation3 + $0x60] sm:$0xf]
        %v1262 = vld [vmem:[#allocation3 + $0x64] sm:$0xf]
        %v1263 = vld [vmem:[#allocation3 + $0x68] sm:$0xf]
        %v1264 = vld [vmem:[#allocation3 + $0x6c] sm:$0xf]
        %v1265 = vld [vmem:[#allocation3 + $0x70] sm:$0xf]
        %v1266 = vld [vmem:[#allocation3 + $0x74] sm:$0xf]
        %v1267 = vld [vmem:[#allocation3 + $0x78] sm:$0xf]
        %v1268 = vld [vmem:[#allocation3 + $0x7c] sm:$0xf]
        %v1301 = vunpack.c.l.b16 %v1237
        %v1302 = vunpack.c.l.b16 %v1238
        %v1303 = vunpack.c.l.b16 %v1239
        %v1304 = vunpack.c.l.b16 %v1240
        %v1305 = vunpack.c.l.b16 %v1241
        %v1306 = vunpack.c.l.b16 %v1242
        %v1307 = vunpack.c.l.b16 %v1243
        %v1308 = vunpack.c.l.b16 %v1244
        %v1309 = vunpack.c.l.b16 %v1245
        %v1310 = vunpack.c.l.b16 %v1246
        %v1311 = vunpack.c.l.b16 %v1247
        %v1312 = vunpack.c.l.b16 %v1248
        %v1313 = vunpack.c.l.b16 %v1249
        %v1314 = vunpack.c.l.b16 %v1250
        %v1315 = vunpack.c.l.b16 %v1251
        %v1316 = vunpack.c.l.b16 %v1252
        %v1317 = vunpack.c.l.b16 %v1253
        %v1318 = vunpack.c.l.b16 %v1254
        %v1319 = vunpack.c.l.b16 %v1255
        %v1320 = vunpack.c.l.b16 %v1256
        %v1321 = vunpack.c.l.b16 %v1257
        %v1322 = vunpack.c.l.b16 %v1258
        %v1323 = vunpack.c.l.b16 %v1259
        %v1324 = vunpack.c.l.b16 %v1260
        %v1325 = vunpack.c.l.b16 %v1261
        %v1326 = vunpack.c.l.b16 %v1262
        %v1327 = vunpack.c.l.b16 %v1263
        %v1328 = vunpack.c.l.b16 %v1264
        %v1329 = vunpack.c.l.b16 %v1265
        %v1330 = vunpack.c.l.b16 %v1266
        %v1331 = vunpack.c.l.b16 %v1267
        %v1332 = vunpack.c.l.b16 %v1268
        %v1333 = vpack.c.b16 %v1302, %v1301
        %v1334 = vpack.c.b16 %v1304, %v1303
        %v1335 = vpack.c.b16 %v1306, %v1305
        %v1336 = vpack.c.b16 %v1308, %v1307
        %v1337 = vpack.c.b16 %v1310, %v1309
        %v1338 = vpack.c.b16 %v1312, %v1311
        %v1339 = vpack.c.b16 %v1314, %v1313
        %v1340 = vpack.c.b16 %v1316, %v1315
        %v1341 = vpack.c.b16 %v1318, %v1317
        %v1342 = vpack.c.b16 %v1320, %v1319
        %v1343 = vpack.c.b16 %v1322, %v1321
        %v1344 = vpack.c.b16 %v1324, %v1323
        %v1345 = vpack.c.b16 %v1326, %v1325
        %v1346 = vpack.c.b16 %v1328, %v1327
        %v1347 = vpack.c.b16 %v1330, %v1329
        %v1348 = vpack.c.b16 %v1332, %v1331
        %1365 = vmatpush.bf16.msra.mxu0 %v1340
        %1366 = vmatpush.bf16.msra.mxu0 %v1339
        %1367 = vmatpush.bf16.msra.mxu0 %v1338
        %1368 = vmatpush.bf16.msra.mxu0 %v1337
        %1369 = vmatpush.bf16.msra.mxu0 %v1336
        %1370 = vmatpush.bf16.msra.mxu0 %v1335
        %1371 = vmatpush.bf16.msra.mxu0 %v1334
        %1372 = vmatpush.bf16.msra.mxu0 %v1333
        %1373 = vmatmul.bf16.gmra.mxu0 %v1205
        %v1374 = vpop.f32.mrf.mxu0
        %v1375 = vadd.f32 0.0, %v1374
        %v1376 = vpop.f32.mrf.mxu0
        %v1377 = vadd.f32 0.0, %v1376
        %1378 = vmatmul.bf16.gmra.mxu0 %v1207
        %v1379 = vpop.f32.mrf.mxu0
        %v1380 = vadd.f32 0.0, %v1379
        %v1381 = vpop.f32.mrf.mxu0
        %v1382 = vadd.f32 0.0, %v1381
        %1383 = vmatmul.bf16.gmra.mxu0 %v1209
        %v1384 = vpop.f32.mrf.mxu0
        %v1385 = vadd.f32 0.0, %v1384
        %v1386 = vpop.f32.mrf.mxu0
        %v1387 = vadd.f32 0.0, %v1386
        %1388 = vmatmul.bf16.gmra.mxu0 %v1211
        %v1389 = vpop.f32.mrf.mxu0
        %v1390 = vadd.f32 0.0, %v1389
        %v1391 = vpop.f32.mrf.mxu0
        %v1392 = vadd.f32 0.0, %v1391
        %1393 = vmatmul.bf16.gmra.mxu0 %v1213
        %v1394 = vpop.f32.mrf.mxu0
        %v1395 = vadd.f32 0.0, %v1394
        %v1396 = vpop.f32.mrf.mxu0
        %v1397 = vadd.f32 0.0, %v1396
        %1398 = vmatmul.bf16.gmra.mxu0 %v1215
        %v1399 = vpop.f32.mrf.mxu0
        %v1400 = vadd.f32 0.0, %v1399
        %v1401 = vpop.f32.mrf.mxu0
        %v1402 = vadd.f32 0.0, %v1401
        %1403 = vmatmul.bf16.gmra.mxu0 %v1217
        %v1404 = vpop.f32.mrf.mxu0
        %v1405 = vadd.f32 0.0, %v1404
        %v1406 = vpop.f32.mrf.mxu0
        %v1407 = vadd.f32 0.0, %v1406
        %1408 = vmatmul.bf16.gmra.mxu0 %v1219
        %v1409 = vpop.f32.mrf.mxu0
        %v1410 = vadd.f32 0.0, %v1409
        %v1411 = vpop.f32.mrf.mxu0
        %v1412 = vadd.f32 0.0, %v1411
        %1413 = vmatmul.bf16.gmra.mxu0 %v1221
        %v1414 = vpop.f32.mrf.mxu0
        %v1415 = vadd.f32 0.0, %v1414
        %v1416 = vpop.f32.mrf.mxu0
        %v1417 = vadd.f32 0.0, %v1416
        %1418 = vmatmul.bf16.gmra.mxu0 %v1223
        %v1419 = vpop.f32.mrf.mxu0
        %v1420 = vadd.f32 0.0, %v1419
        %v1421 = vpop.f32.mrf.mxu0
        %v1422 = vadd.f32 0.0, %v1421
        %1423 = vmatmul.bf16.gmra.mxu0 %v1225
        %v1424 = vpop.f32.mrf.mxu0
        %v1425 = vadd.f32 0.0, %v1424
        %v1426 = vpop.f32.mrf.mxu0
        %v1427 = vadd.f32 0.0, %v1426
        %1428 = vmatmul.bf16.gmra.mxu0 %v1227
        %v1429 = vpop.f32.mrf.mxu0
        %v1430 = vadd.f32 0.0, %v1429
        %v1431 = vpop.f32.mrf.mxu0
        %v1432 = vadd.f32 0.0, %v1431
        %1433 = vmatmul.bf16.gmra.mxu0 %v1229
        %v1434 = vpop.f32.mrf.mxu0
        %v1435 = vadd.f32 0.0, %v1434
        %v1436 = vpop.f32.mrf.mxu0
        %v1437 = vadd.f32 0.0, %v1436
        %1438 = vmatmul.bf16.gmra.mxu0 %v1231
        %v1439 = vpop.f32.mrf.mxu0
        %v1440 = vadd.f32 0.0, %v1439
        %v1441 = vpop.f32.mrf.mxu0
        %v1442 = vadd.f32 0.0, %v1441
        %1443 = vmatmul.bf16.gmra.mxu0 %v1233
        %v1444 = vpop.f32.mrf.mxu0
        %v1445 = vadd.f32 0.0, %v1444
        %v1446 = vpop.f32.mrf.mxu0
        %v1447 = vadd.f32 0.0, %v1446
        %1448 = vmatmul.bf16.gmra.mxu0 %v1235
        %v1449 = vpop.f32.mrf.mxu0
        %v1450 = vadd.f32 0.0, %v1449
        %v1451 = vpop.f32.mrf.mxu0
        %v1452 = vadd.f32 0.0, %v1451
        %1453 = vdwg.mxu0
        %1454 = vmatpush.bf16.msra.mxu0 %v1348
        %1455 = vmatpush.bf16.msra.mxu0 %v1347
        %1456 = vmatpush.bf16.msra.mxu0 %v1346
        %1457 = vmatpush.bf16.msra.mxu0 %v1345
        %1458 = vmatpush.bf16.msra.mxu0 %v1344
        %1459 = vmatpush.bf16.msra.mxu0 %v1343
        %1460 = vmatpush.bf16.msra.mxu0 %v1342
        %1461 = vmatpush.bf16.msra.mxu0 %v1341
        %1462 = vmatmul.bf16.gmra.mxu0 %v1206
        %v1463 = vpop.f32.mrf.mxu0
        %v1464 = vadd.f32 %v1375, %v1463
        %v1465 = vpop.f32.mrf.mxu0
        %v1466 = vadd.f32 %v1377, %v1465
        %1467 = vmatmul.bf16.gmra.mxu0 %v1208
        %v1468 = vpop.f32.mrf.mxu0
        %v1469 = vadd.f32 %v1380, %v1468
        %v1470 = vpop.f32.mrf.mxu0
        %v1471 = vadd.f32 %v1382, %v1470
        %1472 = vmatmul.bf16.gmra.mxu0 %v1210
        %v1473 = vpop.f32.mrf.mxu0
        %v1474 = vadd.f32 %v1385, %v1473
        %v1475 = vpop.f32.mrf.mxu0
        %v1476 = vadd.f32 %v1387, %v1475
        %1477 = vmatmul.bf16.gmra.mxu0 %v1212
        %v1478 = vpop.f32.mrf.mxu0
        %v1479 = vadd.f32 %v1390, %v1478
        %v1480 = vpop.f32.mrf.mxu0
        %v1481 = vadd.f32 %v1392, %v1480
        %1482 = vmatmul.bf16.gmra.mxu0 %v1214
        %v1483 = vpop.f32.mrf.mxu0
        %v1484 = vadd.f32 %v1395, %v1483
        %v1485 = vpop.f32.mrf.mxu0
        %v1486 = vadd.f32 %v1397, %v1485
        %1487 = vmatmul.bf16.gmra.mxu0 %v1216
        %v1488 = vpop.f32.mrf.mxu0
        %v1489 = vadd.f32 %v1400, %v1488
        %v1490 = vpop.f32.mrf.mxu0
        %v1491 = vadd.f32 %v1402, %v1490
        %1492 = vmatmul.bf16.gmra.mxu0 %v1218
        %v1493 = vpop.f32.mrf.mxu0
        %v1494 = vadd.f32 %v1405, %v1493
        %v1495 = vpop.f32.mrf.mxu0
        %v1496 = vadd.f32 %v1407, %v1495
        %1497 = vmatmul.bf16.gmra.mxu0 %v1220
        %v1498 = vpop.f32.mrf.mxu0
        %v1499 = vadd.f32 %v1410, %v1498
        %v1500 = vpop.f32.mrf.mxu0
        %v1501 = vadd.f32 %v1412, %v1500
        %1502 = vmatmul.bf16.gmra.mxu0 %v1222
        %v1503 = vpop.f32.mrf.mxu0
        %v1504 = vadd.f32 %v1415, %v1503
        %v1505 = vpop.f32.mrf.mxu0
        %v1506 = vadd.f32 %v1417, %v1505
        %1507 = vmatmul.bf16.gmra.mxu0 %v1224
        %v1508 = vpop.f32.mrf.mxu0
        %v1509 = vadd.f32 %v1420, %v1508
        %v1510 = vpop.f32.mrf.mxu0
        %v1511 = vadd.f32 %v1422, %v1510
        %1512 = vmatmul.bf16.gmra.mxu0 %v1226
        %v1513 = vpop.f32.mrf.mxu0
        %v1514 = vadd.f32 %v1425, %v1513
        %v1515 = vpop.f32.mrf.mxu0
        %v1516 = vadd.f32 %v1427, %v1515
        %1517 = vmatmul.bf16.gmra.mxu0 %v1228
        %v1518 = vpop.f32.mrf.mxu0
        %v1519 = vadd.f32 %v1430, %v1518
        %v1520 = vpop.f32.mrf.mxu0
        %v1521 = vadd.f32 %v1432, %v1520
        %1522 = vmatmul.bf16.gmra.mxu0 %v1230
        %v1523 = vpop.f32.mrf.mxu0
        %v1524 = vadd.f32 %v1435, %v1523
        %v1525 = vpop.f32.mrf.mxu0
        %v1526 = vadd.f32 %v1437, %v1525
        %1527 = vmatmul.bf16.gmra.mxu0 %v1232
        %v1528 = vpop.f32.mrf.mxu0
        %v1529 = vadd.f32 %v1440, %v1528
        %v1530 = vpop.f32.mrf.mxu0
        %v1531 = vadd.f32 %v1442, %v1530
        %1532 = vmatmul.bf16.gmra.mxu0 %v1234
        %v1533 = vpop.f32.mrf.mxu0
        %v1534 = vadd.f32 %v1445, %v1533
        %v1535 = vpop.f32.mrf.mxu0
        %v1536 = vadd.f32 %v1447, %v1535
        %1537 = vmatmul.bf16.gmra.mxu0 %v1236
        %v1538 = vpop.f32.mrf.mxu0
        %v1539 = vadd.f32 %v1450, %v1538
        %v1540 = vpop.f32.mrf.mxu0
        %v1541 = vadd.f32 %v1452, %v1540
        %1542 = vdwg.mxu0
        %p1543 = scmp.ne.s32.totalorder %s25, 2
        // Predicated region
        $region69: #{tpu_custom_call.1} parent=39 // pred_check
          %p1544 = pneg %p1543
        $region70: #{tpu_custom_call.1} parent=39 // pred_check_branch
          %1546 = sbr.rel (%p1544) target = $region72
        $region71: #{tpu_custom_call.1} parent=39 // pred_region
          %v1547 = vld [vmem:[%s319] sm:$0x1]
          %v1549 = vperm.slane %v1547, 0
          %v1551 = vmul.f32 %v1464, %v1549
          %v1552 = vmul.f32 %v1466, %v1549
          %v1553 = vmul.f32 %v1469, %v1549
          %v1554 = vmul.f32 %v1471, %v1549
          %v1555 = vmul.f32 %v1474, %v1549
          %v1556 = vmul.f32 %v1476, %v1549
          %v1557 = vmul.f32 %v1479, %v1549
          %v1558 = vmul.f32 %v1481, %v1549
          %v1559 = vmul.f32 %v1484, %v1549
          %v1560 = vmul.f32 %v1486, %v1549
          %v1561 = vmul.f32 %v1489, %v1549
          %v1562 = vmul.f32 %v1491, %v1549
          %v1563 = vmul.f32 %v1494, %v1549
          %v1564 = vmul.f32 %v1496, %v1549
          %v1565 = vmul.f32 %v1499, %v1549
          %v1566 = vmul.f32 %v1501, %v1549
          %v1567 = vmul.f32 %v1504, %v1549
          %v1568 = vmul.f32 %v1506, %v1549
          %v1569 = vmul.f32 %v1509, %v1549
          %v1570 = vmul.f32 %v1511, %v1549
          %v1571 = vmul.f32 %v1514, %v1549
          %v1572 = vmul.f32 %v1516, %v1549
          %v1573 = vmul.f32 %v1519, %v1549
          %v1574 = vmul.f32 %v1521, %v1549
          %v1575 = vmul.f32 %v1524, %v1549
          %v1576 = vmul.f32 %v1526, %v1549
          %v1577 = vmul.f32 %v1529, %v1549
          %v1578 = vmul.f32 %v1531, %v1549
          %v1579 = vmul.f32 %v1534, %v1549
          %v1580 = vmul.f32 %v1536, %v1549
          %v1581 = vmul.f32 %v1539, %v1549
          %v1582 = vmul.f32 %v1541, %v1549
          %v1583 = vld [vmem:[%s357] sm:$0x1]
          %v1585 = vperm.slane %v1583, 0
          %v1587 = vadd.f32 %v1551, %v1585
          %v1588 = vadd.f32 %v1552, %v1585
          %v1589 = vadd.f32 %v1553, %v1585
          %v1590 = vadd.f32 %v1554, %v1585
          %v1591 = vadd.f32 %v1555, %v1585
          %v1592 = vadd.f32 %v1556, %v1585
          %v1593 = vadd.f32 %v1557, %v1585
          %v1594 = vadd.f32 %v1558, %v1585
          %v1595 = vadd.f32 %v1559, %v1585
          %v1596 = vadd.f32 %v1560, %v1585
          %v1597 = vadd.f32 %v1561, %v1585
          %v1598 = vadd.f32 %v1562, %v1585
          %v1599 = vadd.f32 %v1563, %v1585
          %v1600 = vadd.f32 %v1564, %v1585
          %v1601 = vadd.f32 %v1565, %v1585
          %v1602 = vadd.f32 %v1566, %v1585
          %v1603 = vadd.f32 %v1567, %v1585
          %v1604 = vadd.f32 %v1568, %v1585
          %v1605 = vadd.f32 %v1569, %v1585
          %v1606 = vadd.f32 %v1570, %v1585
          %v1607 = vadd.f32 %v1571, %v1585
          %v1608 = vadd.f32 %v1572, %v1585
          %v1609 = vadd.f32 %v1573, %v1585
          %v1610 = vadd.f32 %v1574, %v1585
          %v1611 = vadd.f32 %v1575, %v1585
          %v1612 = vadd.f32 %v1576, %v1585
          %v1613 = vadd.f32 %v1577, %v1585
          %v1614 = vadd.f32 %v1578, %v1585
          %v1615 = vadd.f32 %v1579, %v1585
          %v1616 = vadd.f32 %v1580, %v1585
          %v1617 = vadd.f32 %v1581, %v1585
          %v1618 = vadd.f32 %v1582, %v1585
          %v1619 = vmax.f32 %v1587, 0.0
          %v1620 = vmax.f32 %v1588, 0.0
          %v1621 = vmax.f32 %v1589, 0.0
          %v1622 = vmax.f32 %v1590, 0.0
          %v1623 = vmax.f32 %v1591, 0.0
          %v1624 = vmax.f32 %v1592, 0.0
          %v1625 = vmax.f32 %v1593, 0.0
          %v1626 = vmax.f32 %v1594, 0.0
          %v1627 = vmax.f32 %v1595, 0.0
          %v1628 = vmax.f32 %v1596, 0.0
          %v1629 = vmax.f32 %v1597, 0.0
          %v1630 = vmax.f32 %v1598, 0.0
          %v1631 = vmax.f32 %v1599, 0.0
          %v1632 = vmax.f32 %v1600, 0.0
          %v1633 = vmax.f32 %v1601, 0.0
          %v1634 = vmax.f32 %v1602, 0.0
          %v1635 = vmax.f32 %v1603, 0.0
          %v1636 = vmax.f32 %v1604, 0.0
          %v1637 = vmax.f32 %v1605, 0.0
          %v1638 = vmax.f32 %v1606, 0.0
          %v1639 = vmax.f32 %v1607, 0.0
          %v1640 = vmax.f32 %v1608, 0.0
          %v1641 = vmax.f32 %v1609, 0.0
          %v1642 = vmax.f32 %v1610, 0.0
          %v1643 = vmax.f32 %v1611, 0.0
          %v1644 = vmax.f32 %v1612, 0.0
          %v1645 = vmax.f32 %v1613, 0.0
          %v1646 = vmax.f32 %v1614, 0.0
          %v1647 = vmax.f32 %v1615, 0.0
          %v1648 = vmax.f32 %v1616, 0.0
          %v1649 = vmax.f32 %v1617, 0.0
          %v1650 = vmax.f32 %v1618, 0.0
          %s1651 = smul.u32 %s26, 256
          %v1652 = vpack.c.bf16 %v1619, %v1619
          %v1653 = vpack.c.bf16 %v1620, %v1620
          %v1654 = vpack.c.bf16 %v1621, %v1621
          %v1655 = vpack.c.bf16 %v1622, %v1622
          %v1656 = vpack.c.bf16 %v1623, %v1623
          %v1657 = vpack.c.bf16 %v1624, %v1624
          %v1658 = vpack.c.bf16 %v1625, %v1625
          %v1659 = vpack.c.bf16 %v1626, %v1626
          %v1660 = vpack.c.bf16 %v1627, %v1627
          %v1661 = vpack.c.bf16 %v1628, %v1628
          %v1662 = vpack.c.bf16 %v1629, %v1629
          %v1663 = vpack.c.bf16 %v1630, %v1630
          %v1664 = vpack.c.bf16 %v1631, %v1631
          %v1665 = vpack.c.bf16 %v1632, %v1632
          %v1666 = vpack.c.bf16 %v1633, %v1633
          %v1667 = vpack.c.bf16 %v1634, %v1634
          %v1668 = vpack.c.bf16 %v1635, %v1635
          %v1669 = vpack.c.bf16 %v1636, %v1636
          %v1670 = vpack.c.bf16 %v1637, %v1637
          %v1671 = vpack.c.bf16 %v1638, %v1638
          %v1672 = vpack.c.bf16 %v1639, %v1639
          %v1673 = vpack.c.bf16 %v1640, %v1640
          %v1674 = vpack.c.bf16 %v1641, %v1641
          %v1675 = vpack.c.bf16 %v1642, %v1642
          %v1676 = vpack.c.bf16 %v1643, %v1643
          %v1677 = vpack.c.bf16 %v1644, %v1644
          %v1678 = vpack.c.bf16 %v1645, %v1645
          %v1679 = vpack.c.bf16 %v1646, %v1646
          %v1680 = vpack.c.bf16 %v1647, %v1647
          %v1681 = vpack.c.bf16 %v1648, %v1648
          %v1682 = vpack.c.bf16 %v1649, %v1649
          %v1683 = vpack.c.bf16 %v1650, %v1650
          %s1684 = sshra.s32 %s1651, 3
          %s1685 = sand.u32 %s1651, 7
          %s1686 = smul.addr %s1684, 4
          %s1687 = scalar_lea.vmem [#allocation2], %s1686
          %1688 = vst [vmem:[%s1687] sm:$0xf] %v1652
          %1689 = vst [vmem:[%s1687 + $0x4] sm:$0xf] %v1653
          %1690 = vst [vmem:[%s1687 + $0x8] sm:$0xf] %v1654
          %1691 = vst [vmem:[%s1687 + $0xc] sm:$0xf] %v1655
          %1692 = vst [vmem:[%s1687 + $0x10] sm:$0xf] %v1656
          %1693 = vst [vmem:[%s1687 + $0x14] sm:$0xf] %v1657
          %1694 = vst [vmem:[%s1687 + $0x18] sm:$0xf] %v1658
          %1695 = vst [vmem:[%s1687 + $0x1c] sm:$0xf] %v1659
          %1696 = vst [vmem:[%s1687 + $0x20] sm:$0xf] %v1660
          %1697 = vst [vmem:[%s1687 + $0x24] sm:$0xf] %v1661
          %1698 = vst [vmem:[%s1687 + $0x28] sm:$0xf] %v1662
          %1699 = vst [vmem:[%s1687 + $0x2c] sm:$0xf] %v1663
          %1700 = vst [vmem:[%s1687 + $0x30] sm:$0xf] %v1664
          %1701 = vst [vmem:[%s1687 + $0x34] sm:$0xf] %v1665
          %1702 = vst [vmem:[%s1687 + $0x38] sm:$0xf] %v1666
          %1703 = vst [vmem:[%s1687 + $0x3c] sm:$0xf] %v1667
          %1704 = vst [vmem:[%s1687 + $0x40] sm:$0xf] %v1668
          %1705 = vst [vmem:[%s1687 + $0x44] sm:$0xf] %v1669
          %1706 = vst [vmem:[%s1687 + $0x48] sm:$0xf] %v1670
          %1707 = vst [vmem:[%s1687 + $0x4c] sm:$0xf] %v1671
          %1708 = vst [vmem:[%s1687 + $0x50] sm:$0xf] %v1672
          %1709 = vst [vmem:[%s1687 + $0x54] sm:$0xf] %v1673
          %1710 = vst [vmem:[%s1687 + $0x58] sm:$0xf] %v1674
          %1711 = vst [vmem:[%s1687 + $0x5c] sm:$0xf] %v1675
          %1712 = vst [vmem:[%s1687 + $0x60] sm:$0xf] %v1676
          %1713 = vst [vmem:[%s1687 + $0x64] sm:$0xf] %v1677
          %1714 = vst [vmem:[%s1687 + $0x68] sm:$0xf] %v1678
          %1715 = vst [vmem:[%s1687 + $0x6c] sm:$0xf] %v1679
          %1716 = vst [vmem:[%s1687 + $0x70] sm:$0xf] %v1680
          %1717 = vst [vmem:[%s1687 + $0x74] sm:$0xf] %v1681
          %1718 = vst [vmem:[%s1687 + $0x78] sm:$0xf] %v1682
          %1719 = vst [vmem:[%s1687 + $0x7c] sm:$0xf] %v1683
        $region72: #{tpu_custom_call.1} parent=39 // pred_fallthru
          _
        %p1720 = scmp.eq.s32.totalorder %s25, 2
        // Predicated region
        $region73: #{tpu_custom_call.1} parent=39 // pred_check
          %p1721 = pneg %p1720
        $region74: #{tpu_custom_call.1} parent=39 // pred_check_branch
          %1723 = sbr.rel (%p1721) target = $region76
        $region75: #{tpu_custom_call.1} parent=39 // pred_region
          %v1724 = vlaneseq
          %v1725 = vand.u32 %v1724, 127
          %vm1726 = vcmp.lt.s32.totalorder %v1725, 32
          %v1727 = vsel %vm1726, %v1464, -1e+30
          %v1728 = vsel %vm1726, %v1466, -1e+30
          %v1729 = vsel %vm1726, %v1469, -1e+30
          %v1730 = vsel %vm1726, %v1471, -1e+30
          %v1731 = vsel %vm1726, %v1474, -1e+30
          %v1732 = vsel %vm1726, %v1476, -1e+30
          %v1733 = vsel %vm1726, %v1479, -1e+30
          %v1734 = vsel %vm1726, %v1481, -1e+30
          %v1735 = vsel %vm1726, %v1484, -1e+30
          %v1736 = vsel %vm1726, %v1486, -1e+30
          %v1737 = vsel %vm1726, %v1489, -1e+30
          %v1738 = vsel %vm1726, %v1491, -1e+30
          %v1739 = vsel %vm1726, %v1494, -1e+30
          %v1740 = vsel %vm1726, %v1496, -1e+30
          %v1741 = vsel %vm1726, %v1499, -1e+30
          %v1742 = vsel %vm1726, %v1501, -1e+30
          %v1743 = vsel %vm1726, %v1504, -1e+30
          %v1744 = vsel %vm1726, %v1506, -1e+30
          %v1745 = vsel %vm1726, %v1509, -1e+30
          %v1746 = vsel %vm1726, %v1511, -1e+30
          %v1747 = vsel %vm1726, %v1514, -1e+30
          %v1748 = vsel %vm1726, %v1516, -1e+30
          %v1749 = vsel %vm1726, %v1519, -1e+30
          %v1750 = vsel %vm1726, %v1521, -1e+30
          %v1751 = vsel %vm1726, %v1524, -1e+30
          %v1752 = vsel %vm1726, %v1526, -1e+30
          %v1753 = vsel %vm1726, %v1529, -1e+30
          %v1754 = vsel %vm1726, %v1531, -1e+30
          %v1755 = vsel %vm1726, %v1534, -1e+30
          %v1756 = vsel %vm1726, %v1536, -1e+30
          %v1757 = vsel %vm1726, %v1539, -1e+30
          %v1758 = vsel %vm1726, %v1541, -1e+30
          %1759 = vmax.xlane.f32.xlu0 %v1727
          %v1760 = vpop.xlane.xlu0 %1759
          %1761 = vmax.xlane.f32.xlu0 %v1728
          %v1762 = vpop.xlane.xlu0 %1761
          %1763 = vmax.xlane.f32.xlu0 %v1729
          %v1764 = vpop.xlane.xlu0 %1763
          %1765 = vmax.xlane.f32.xlu0 %v1730
          %v1766 = vpop.xlane.xlu0 %1765
          %1767 = vmax.xlane.f32.xlu0 %v1731
          %v1768 = vpop.xlane.xlu0 %1767
          %1769 = vmax.xlane.f32.xlu0 %v1732
          %v1770 = vpop.xlane.xlu0 %1769
          %1771 = vmax.xlane.f32.xlu0 %v1733
          %v1772 = vpop.xlane.xlu0 %1771
          %1773 = vmax.xlane.f32.xlu0 %v1734
          %v1774 = vpop.xlane.xlu0 %1773
          %1775 = vmax.xlane.f32.xlu0 %v1735
          %v1776 = vpop.xlane.xlu0 %1775
          %1777 = vmax.xlane.f32.xlu0 %v1736
          %v1778 = vpop.xlane.xlu0 %1777
          %1779 = vmax.xlane.f32.xlu0 %v1737
          %v1780 = vpop.xlane.xlu0 %1779
          %1781 = vmax.xlane.f32.xlu0 %v1738
          %v1782 = vpop.xlane.xlu0 %1781
          %1783 = vmax.xlane.f32.xlu0 %v1739
          %v1784 = vpop.xlane.xlu0 %1783
          %1785 = vmax.xlane.f32.xlu0 %v1740
          %v1786 = vpop.xlane.xlu0 %1785
          %1787 = vmax.xlane.f32.xlu0 %v1741
          %v1788 = vpop.xlane.xlu0 %1787
          %1789 = vmax.xlane.f32.xlu0 %v1742
          %v1790 = vpop.xlane.xlu0 %1789
          %1791 = vmax.xlane.f32.xlu0 %v1743
          %v1792 = vpop.xlane.xlu0 %1791
          %1793 = vmax.xlane.f32.xlu0 %v1744
          %v1794 = vpop.xlane.xlu0 %1793
          %1795 = vmax.xlane.f32.xlu0 %v1745
          %v1796 = vpop.xlane.xlu0 %1795
          %1797 = vmax.xlane.f32.xlu0 %v1746
          %v1798 = vpop.xlane.xlu0 %1797
          %1799 = vmax.xlane.f32.xlu0 %v1747
          %v1800 = vpop.xlane.xlu0 %1799
          %1801 = vmax.xlane.f32.xlu0 %v1748
          %v1802 = vpop.xlane.xlu0 %1801
          %1803 = vmax.xlane.f32.xlu0 %v1749
          %v1804 = vpop.xlane.xlu0 %1803
          %1805 = vmax.xlane.f32.xlu0 %v1750
          %v1806 = vpop.xlane.xlu0 %1805
          %1807 = vmax.xlane.f32.xlu0 %v1751
          %v1808 = vpop.xlane.xlu0 %1807
          %1809 = vmax.xlane.f32.xlu0 %v1752
          %v1810 = vpop.xlane.xlu0 %1809
          %1811 = vmax.xlane.f32.xlu0 %v1753
          %v1812 = vpop.xlane.xlu0 %1811
          %1813 = vmax.xlane.f32.xlu0 %v1754
          %v1814 = vpop.xlane.xlu0 %1813
          %1815 = vmax.xlane.f32.xlu0 %v1755
          %v1816 = vpop.xlane.xlu0 %1815
          %1817 = vmax.xlane.f32.xlu0 %v1756
          %v1818 = vpop.xlane.xlu0 %1817
          %1819 = vmax.xlane.f32.xlu0 %v1757
          %v1820 = vpop.xlane.xlu0 %1819
          %1821 = vmax.xlane.f32.xlu0 %v1758
          %v1822 = vpop.xlane.xlu0 %1821
          %v1823 = vsub.f32 %v1727, %v1760
          %v1824 = vsub.f32 %v1728, %v1762
          %v1825 = vsub.f32 %v1729, %v1764
          %v1826 = vsub.f32 %v1730, %v1766
          %v1827 = vsub.f32 %v1731, %v1768
          %v1828 = vsub.f32 %v1732, %v1770
          %v1829 = vsub.f32 %v1733, %v1772
          %v1830 = vsub.f32 %v1734, %v1774
          %v1831 = vsub.f32 %v1735, %v1776
          %v1832 = vsub.f32 %v1736, %v1778
          %v1833 = vsub.f32 %v1737, %v1780
          %v1834 = vsub.f32 %v1738, %v1782
          %v1835 = vsub.f32 %v1739, %v1784
          %v1836 = vsub.f32 %v1740, %v1786
          %v1837 = vsub.f32 %v1741, %v1788
          %v1838 = vsub.f32 %v1742, %v1790
          %v1839 = vsub.f32 %v1743, %v1792
          %v1840 = vsub.f32 %v1744, %v1794
          %v1841 = vsub.f32 %v1745, %v1796
          %v1842 = vsub.f32 %v1746, %v1798
          %v1843 = vsub.f32 %v1747, %v1800
          %v1844 = vsub.f32 %v1748, %v1802
          %v1845 = vsub.f32 %v1749, %v1804
          %v1846 = vsub.f32 %v1750, %v1806
          %v1847 = vsub.f32 %v1751, %v1808
          %v1848 = vsub.f32 %v1752, %v1810
          %v1849 = vsub.f32 %v1753, %v1812
          %v1850 = vsub.f32 %v1754, %v1814
          %v1851 = vsub.f32 %v1755, %v1816
          %v1852 = vsub.f32 %v1756, %v1818
          %v1853 = vsub.f32 %v1757, %v1820
          %v1854 = vsub.f32 %v1758, %v1822
          %v1855 = vmul.f32 %v1823, 1.442695
          %v1856 = vpow.pop %v1855
          %v1857 = vmul.f32 %v1824, 1.442695
          %v1858 = vpow.pop %v1857
          %v1859 = vmul.f32 %v1825, 1.442695
          %v1860 = vpow.pop %v1859
          %v1861 = vmul.f32 %v1826, 1.442695
          %v1862 = vpow.pop %v1861
          %v1863 = vmul.f32 %v1827, 1.442695
          %v1864 = vpow.pop %v1863
          %v1865 = vmul.f32 %v1828, 1.442695
          %v1866 = vpow.pop %v1865
          %v1867 = vmul.f32 %v1829, 1.442695
          %v1868 = vpow.pop %v1867
          %v1869 = vmul.f32 %v1830, 1.442695
          %v1870 = vpow.pop %v1869
          %v1871 = vmul.f32 %v1831, 1.442695
          %v1872 = vpow.pop %v1871
          %v1873 = vmul.f32 %v1832, 1.442695
          %v1874 = vpow.pop %v1873
          %v1875 = vmul.f32 %v1833, 1.442695
          %v1876 = vpow.pop %v1875
          %v1877 = vmul.f32 %v1834, 1.442695
          %v1878 = vpow.pop %v1877
          %v1879 = vmul.f32 %v1835, 1.442695
          %v1880 = vpow.pop %v1879
          %v1881 = vmul.f32 %v1836, 1.442695
          %v1882 = vpow.pop %v1881
          %v1883 = vmul.f32 %v1837, 1.442695
          %v1884 = vpow.pop %v1883
          %v1885 = vmul.f32 %v1838, 1.442695
          %v1886 = vpow.pop %v1885
          %v1887 = vmul.f32 %v1839, 1.442695
          %v1888 = vpow.pop %v1887
          %v1889 = vmul.f32 %v1840, 1.442695
          %v1890 = vpow.pop %v1889
          %v1891 = vmul.f32 %v1841, 1.442695
          %v1892 = vpow.pop %v1891
          %v1893 = vmul.f32 %v1842, 1.442695
          %v1894 = vpow.pop %v1893
          %v1895 = vmul.f32 %v1843, 1.442695
          %v1896 = vpow.pop %v1895
          %v1897 = vmul.f32 %v1844, 1.442695
          %v1898 = vpow.pop %v1897
          %v1899 = vmul.f32 %v1845, 1.442695
          %v1900 = vpow.pop %v1899
          %v1901 = vmul.f32 %v1846, 1.442695
          %v1902 = vpow.pop %v1901
          %v1903 = vmul.f32 %v1847, 1.442695
          %v1904 = vpow.pop %v1903
          %v1905 = vmul.f32 %v1848, 1.442695
          %v1906 = vpow.pop %v1905
          %v1907 = vmul.f32 %v1849, 1.442695
          %v1908 = vpow.pop %v1907
          %v1909 = vmul.f32 %v1850, 1.442695
          %v1910 = vpow.pop %v1909
          %v1911 = vmul.f32 %v1851, 1.442695
          %v1912 = vpow.pop %v1911
          %v1913 = vmul.f32 %v1852, 1.442695
          %v1914 = vpow.pop %v1913
          %v1915 = vmul.f32 %v1853, 1.442695
          %v1916 = vpow.pop %v1915
          %v1917 = vmul.f32 %v1854, 1.442695
          %v1918 = vpow.pop %v1917
          %1919 = vadd.xlane.f32.xlu0 %v1856
          %v1920 = vpop.xlane.xlu0 %1919
          %1921 = vadd.xlane.f32.xlu0 %v1858
          %v1922 = vpop.xlane.xlu0 %1921
          %1923 = vadd.xlane.f32.xlu0 %v1860
          %v1924 = vpop.xlane.xlu0 %1923
          %1925 = vadd.xlane.f32.xlu0 %v1862
          %v1926 = vpop.xlane.xlu0 %1925
          %1927 = vadd.xlane.f32.xlu0 %v1864
          %v1928 = vpop.xlane.xlu0 %1927
          %1929 = vadd.xlane.f32.xlu0 %v1866
          %v1930 = vpop.xlane.xlu0 %1929
          %1931 = vadd.xlane.f32.xlu0 %v1868
          %v1932 = vpop.xlane.xlu0 %1931
          %1933 = vadd.xlane.f32.xlu0 %v1870
          %v1934 = vpop.xlane.xlu0 %1933
          %1935 = vadd.xlane.f32.xlu0 %v1872
          %v1936 = vpop.xlane.xlu0 %1935
          %1937 = vadd.xlane.f32.xlu0 %v1874
          %v1938 = vpop.xlane.xlu0 %1937
          %1939 = vadd.xlane.f32.xlu0 %v1876
          %v1940 = vpop.xlane.xlu0 %1939
          %1941 = vadd.xlane.f32.xlu0 %v1878
          %v1942 = vpop.xlane.xlu0 %1941
          %1943 = vadd.xlane.f32.xlu0 %v1880
          %v1944 = vpop.xlane.xlu0 %1943
          %1945 = vadd.xlane.f32.xlu0 %v1882
          %v1946 = vpop.xlane.xlu0 %1945
          %1947 = vadd.xlane.f32.xlu0 %v1884
          %v1948 = vpop.xlane.xlu0 %1947
          %1949 = vadd.xlane.f32.xlu0 %v1886
          %v1950 = vpop.xlane.xlu0 %1949
          %1951 = vadd.xlane.f32.xlu0 %v1888
          %v1952 = vpop.xlane.xlu0 %1951
          %1953 = vadd.xlane.f32.xlu0 %v1890
          %v1954 = vpop.xlane.xlu0 %1953
          %1955 = vadd.xlane.f32.xlu0 %v1892
          %v1956 = vpop.xlane.xlu0 %1955
          %1957 = vadd.xlane.f32.xlu0 %v1894
          %v1958 = vpop.xlane.xlu0 %1957
          %1959 = vadd.xlane.f32.xlu0 %v1896
          %v1960 = vpop.xlane.xlu0 %1959
          %1961 = vadd.xlane.f32.xlu0 %v1898
          %v1962 = vpop.xlane.xlu0 %1961
          %1963 = vadd.xlane.f32.xlu0 %v1900
          %v1964 = vpop.xlane.xlu0 %1963
          %1965 = vadd.xlane.f32.xlu0 %v1902
          %v1966 = vpop.xlane.xlu0 %1965
          %1967 = vadd.xlane.f32.xlu0 %v1904
          %v1968 = vpop.xlane.xlu0 %1967
          %1969 = vadd.xlane.f32.xlu0 %v1906
          %v1970 = vpop.xlane.xlu0 %1969
          %1971 = vadd.xlane.f32.xlu0 %v1908
          %v1972 = vpop.xlane.xlu0 %1971
          %1973 = vadd.xlane.f32.xlu0 %v1910
          %v1974 = vpop.xlane.xlu0 %1973
          %1975 = vadd.xlane.f32.xlu0 %v1912
          %v1976 = vpop.xlane.xlu0 %1975
          %1977 = vadd.xlane.f32.xlu0 %v1914
          %v1978 = vpop.xlane.xlu0 %1977
          %1979 = vadd.xlane.f32.xlu0 %v1916
          %v1980 = vpop.xlane.xlu0 %1979
          %1981 = vadd.xlane.f32.xlu0 %v1918
          %v1982 = vpop.xlane.xlu0 %1981
          %v1983 = vlog2.pop %v1920
          %v1984 = vmul.f32 %v1983, 0.6931472
          %v1985 = vlog2.pop %v1922
          %v1986 = vmul.f32 %v1985, 0.6931472
          %v1987 = vlog2.pop %v1924
          %v1988 = vmul.f32 %v1987, 0.6931472
          %v1989 = vlog2.pop %v1926
          %v1990 = vmul.f32 %v1989, 0.6931472
          %v1991 = vlog2.pop %v1928
          %v1992 = vmul.f32 %v1991, 0.6931472
          %v1993 = vlog2.pop %v1930
          %v1994 = vmul.f32 %v1993, 0.6931472
          %v1995 = vlog2.pop %v1932
          %v1996 = vmul.f32 %v1995, 0.6931472
          %v1997 = vlog2.pop %v1934
          %v1998 = vmul.f32 %v1997, 0.6931472
          %v1999 = vlog2.pop %v1936
          %v2000 = vmul.f32 %v1999, 0.6931472
          %v2001 = vlog2.pop %v1938
          %v2002 = vmul.f32 %v2001, 0.6931472
          %v2003 = vlog2.pop %v1940
          %v2004 = vmul.f32 %v2003, 0.6931472
          %v2005 = vlog2.pop %v1942
          %v2006 = vmul.f32 %v2005, 0.6931472
          %v2007 = vlog2.pop %v1944
          %v2008 = vmul.f32 %v2007, 0.6931472
          %v2009 = vlog2.pop %v1946
          %v2010 = vmul.f32 %v2009, 0.6931472
          %v2011 = vlog2.pop %v1948
          %v2012 = vmul.f32 %v2011, 0.6931472
          %v2013 = vlog2.pop %v1950
          %v2014 = vmul.f32 %v2013, 0.6931472
          %v2015 = vlog2.pop %v1952
          %v2016 = vmul.f32 %v2015, 0.6931472
          %v2017 = vlog2.pop %v1954
          %v2018 = vmul.f32 %v2017, 0.6931472
          %v2019 = vlog2.pop %v1956
          %v2020 = vmul.f32 %v2019, 0.6931472
          %v2021 = vlog2.pop %v1958
          %v2022 = vmul.f32 %v2021, 0.6931472
          %v2023 = vlog2.pop %v1960
          %v2024 = vmul.f32 %v2023, 0.6931472
          %v2025 = vlog2.pop %v1962
          %v2026 = vmul.f32 %v2025, 0.6931472
          %v2027 = vlog2.pop %v1964
          %v2028 = vmul.f32 %v2027, 0.6931472
          %v2029 = vlog2.pop %v1966
          %v2030 = vmul.f32 %v2029, 0.6931472
          %v2031 = vlog2.pop %v1968
          %v2032 = vmul.f32 %v2031, 0.6931472
          %v2033 = vlog2.pop %v1970
          %v2034 = vmul.f32 %v2033, 0.6931472
          %v2035 = vlog2.pop %v1972
          %v2036 = vmul.f32 %v2035, 0.6931472
          %v2037 = vlog2.pop %v1974
          %v2038 = vmul.f32 %v2037, 0.6931472
          %v2039 = vlog2.pop %v1976
          %v2040 = vmul.f32 %v2039, 0.6931472
          %v2041 = vlog2.pop %v1978
          %v2042 = vmul.f32 %v2041, 0.6931472
          %v2043 = vlog2.pop %v1980
          %v2044 = vmul.f32 %v2043, 0.6931472
          %v2045 = vlog2.pop %v1982
          %v2046 = vmul.f32 %v2045, 0.6931472
          %v2047 = vsub.f32 %v1823, %v1984
          %v2048 = vsub.f32 %v1824, %v1986
          %v2049 = vsub.f32 %v1825, %v1988
          %v2050 = vsub.f32 %v1826, %v1990
          %v2051 = vsub.f32 %v1827, %v1992
          %v2052 = vsub.f32 %v1828, %v1994
          %v2053 = vsub.f32 %v1829, %v1996
          %v2054 = vsub.f32 %v1830, %v1998
          %v2055 = vsub.f32 %v1831, %v2000
          %v2056 = vsub.f32 %v1832, %v2002
          %v2057 = vsub.f32 %v1833, %v2004
          %v2058 = vsub.f32 %v1834, %v2006
          %v2059 = vsub.f32 %v1835, %v2008
          %v2060 = vsub.f32 %v1836, %v2010
          %v2061 = vsub.f32 %v1837, %v2012
          %v2062 = vsub.f32 %v1838, %v2014
          %v2063 = vsub.f32 %v1839, %v2016
          %v2064 = vsub.f32 %v1840, %v2018
          %v2065 = vsub.f32 %v1841, %v2020
          %v2066 = vsub.f32 %v1842, %v2022
          %v2067 = vsub.f32 %v1843, %v2024
          %v2068 = vsub.f32 %v1844, %v2026
          %v2069 = vsub.f32 %v1845, %v2028
          %v2070 = vsub.f32 %v1846, %v2030
          %v2071 = vsub.f32 %v1847, %v2032
          %v2072 = vsub.f32 %v1848, %v2034
          %v2073 = vsub.f32 %v1849, %v2036
          %v2074 = vsub.f32 %v1850, %v2038
          %v2075 = vsub.f32 %v1851, %v2040
          %v2076 = vsub.f32 %v1852, %v2042
          %v2077 = vsub.f32 %v1853, %v2044
          %v2078 = vsub.f32 %v1854, %v2046
          %v2079 = vsel %vm1726, %v2047, 0.0
          %v2080 = vsel %vm1726, %v2048, 0.0
          %v2081 = vsel %vm1726, %v2049, 0.0
          %v2082 = vsel %vm1726, %v2050, 0.0
          %v2083 = vsel %vm1726, %v2051, 0.0
          %v2084 = vsel %vm1726, %v2052, 0.0
          %v2085 = vsel %vm1726, %v2053, 0.0
          %v2086 = vsel %vm1726, %v2054, 0.0
          %v2087 = vsel %vm1726, %v2055, 0.0
          %v2088 = vsel %vm1726, %v2056, 0.0
          %v2089 = vsel %vm1726, %v2057, 0.0
          %v2090 = vsel %vm1726, %v2058, 0.0
          %v2091 = vsel %vm1726, %v2059, 0.0
          %v2092 = vsel %vm1726, %v2060, 0.0
          %v2093 = vsel %vm1726, %v2061, 0.0
          %v2094 = vsel %vm1726, %v2062, 0.0
          %v2095 = vsel %vm1726, %v2063, 0.0
          %v2096 = vsel %vm1726, %v2064, 0.0
          %v2097 = vsel %vm1726, %v2065, 0.0
          %v2098 = vsel %vm1726, %v2066, 0.0
          %v2099 = vsel %vm1726, %v2067, 0.0
          %v2100 = vsel %vm1726, %v2068, 0.0
          %v2101 = vsel %vm1726, %v2069, 0.0
          %v2102 = vsel %vm1726, %v2070, 0.0
          %v2103 = vsel %vm1726, %v2071, 0.0
          %v2104 = vsel %vm1726, %v2072, 0.0
          %v2105 = vsel %vm1726, %v2073, 0.0
          %v2106 = vsel %vm1726, %v2074, 0.0
          %v2107 = vsel %vm1726, %v2075, 0.0
          %v2108 = vsel %vm1726, %v2076, 0.0
          %v2109 = vsel %vm1726, %v2077, 0.0
          %v2110 = vsel %vm1726, %v2078, 0.0
          %2111 = vst [vmem:[#allocation11] sm:$0xff] %v2079
          %2112 = vst [vmem:[#allocation11 + $0x8] sm:$0xff] %v2080
          %2113 = vst [vmem:[#allocation11 + $0x10] sm:$0xff] %v2081
          %2114 = vst [vmem:[#allocation11 + $0x18] sm:$0xff] %v2082
          %2115 = vst [vmem:[#allocation11 + $0x20] sm:$0xff] %v2083
          %2116 = vst [vmem:[#allocation11 + $0x28] sm:$0xff] %v2084
          %2117 = vst [vmem:[#allocation11 + $0x30] sm:$0xff] %v2085
          %2118 = vst [vmem:[#allocation11 + $0x38] sm:$0xff] %v2086
          %2119 = vst [vmem:[#allocation11 + $0x40] sm:$0xff] %v2087
          %2120 = vst [vmem:[#allocation11 + $0x48] sm:$0xff] %v2088
          %2121 = vst [vmem:[#allocation11 + $0x50] sm:$0xff] %v2089
          %2122 = vst [vmem:[#allocation11 + $0x58] sm:$0xff] %v2090
          %2123 = vst [vmem:[#allocation11 + $0x60] sm:$0xff] %v2091
          %2124 = vst [vmem:[#allocation11 + $0x68] sm:$0xff] %v2092
          %2125 = vst [vmem:[#allocation11 + $0x70] sm:$0xff] %v2093
          %2126 = vst [vmem:[#allocation11 + $0x78] sm:$0xff] %v2094
          %2127 = vst [vmem:[#allocation11 + $0x80] sm:$0xff] %v2095
          %2128 = vst [vmem:[#allocation11 + $0x88] sm:$0xff] %v2096
          %2129 = vst [vmem:[#allocation11 + $0x90] sm:$0xff] %v2097
          %2130 = vst [vmem:[#allocation11 + $0x98] sm:$0xff] %v2098
          %2131 = vst [vmem:[#allocation11 + $0xa0] sm:$0xff] %v2099
          %2132 = vst [vmem:[#allocation11 + $0xa8] sm:$0xff] %v2100
          %2133 = vst [vmem:[#allocation11 + $0xb0] sm:$0xff] %v2101
          %2134 = vst [vmem:[#allocation11 + $0xb8] sm:$0xff] %v2102
          %2135 = vst [vmem:[#allocation11 + $0xc0] sm:$0xff] %v2103
          %2136 = vst [vmem:[#allocation11 + $0xc8] sm:$0xff] %v2104
          %2137 = vst [vmem:[#allocation11 + $0xd0] sm:$0xff] %v2105
          %2138 = vst [vmem:[#allocation11 + $0xd8] sm:$0xff] %v2106
          %2139 = vst [vmem:[#allocation11 + $0xe0] sm:$0xff] %v2107
          %2140 = vst [vmem:[#allocation11 + $0xe8] sm:$0xff] %v2108
          %2141 = vst [vmem:[#allocation11 + $0xf0] sm:$0xff] %v2109
          %2142 = vst [vmem:[#allocation11 + $0xf8] sm:$0xff] %v2110
        $region76: #{tpu_custom_call.1} parent=39 // pred_fallthru
          _
        // Predicated region
        $region77: #{tpu_custom_call.1} parent=39 // pred_check
          %p2143 = pneg %p178
        $region78: #{tpu_custom_call.1} parent=39 // pred_check_branch
          %2145 = sbr.rel (%p2143) target = $region80
        $region79: #{tpu_custom_call.1} parent=39 // pred_region
          %s2146 = smul.u32 32, %s26
          %2148 = vsyncadd [#allocation6], 0
          %s2149 = smul.addr %s2146, 8
          %s2150 = scalar_lea.hbm %s5, %s2149
          %s2151 = sshll.u32 [#allocation11], 4
          %s2152 = int_to_ptr.vmem [resolvable:$true] %s2151
          %s2153 = sshll.u32 %s2150, 4
          %s2154 = int_to_ptr.hbm [resolvable:$true] %s2153
          %2159 = dma.vmem_to_hbm [thread:$0]  %s2152, 4096, %s2154, [#allocation6], 128, 128, 8
        $region80: #{tpu_custom_call.1} parent=39 // pred_fallthru
          _
        // Predicated region
        $region81: #{tpu_custom_call.1} parent=39 // pred_check
          %p2160 = pneg %p178
        $region82: #{tpu_custom_call.1} parent=39 // pred_check_branch
          %2162 = sbr.rel (%p2160) target = $region84
        $region83: #{tpu_custom_call.1} parent=39 // pred_region
          %2164 = dma.done [#allocation6], 4096
        $region84: #{tpu_custom_call.1} parent=39 // pred_fallthru
          _
      $region40: #{tpu_custom_call.1} parent=5 // pred_fallthru
        _
      %p2165 = scmp.le.s32.totalorder 2, %s16
      // Predicated region
      $region85: #{tpu_custom_call.1} parent=5 // pred_check
        %p2166 = pneg %p2165
      $region86: #{tpu_custom_call.1} parent=5 // pred_check_branch
        %2168 = sbr.rel (%p2166) target = $region88
      $region87: #{tpu_custom_call.1} parent=5 // pred_region
        %s2169 = ssub.s32 %s16, 2
      $region88: #{tpu_custom_call.1} parent=5 // pred_fallthru
        _
    $region6: #{tpu_custom_call.1} parent=1 // loop_footer
      %s20 = sadd.s32 1, %s16
    $region7: #{tpu_custom_call.1} parent=1 // loop_footer_branch
      %15 = sbr.rel target = $region3
    $region8: #{tpu_custom_call.1} parent=1 // loop_exit
      _
    %2170 = vsyncpa [#allocation5], 1
    %s2171 = scalar_lea.sflag [#allocation5], 1
    %2172 = vsyncpa %s2171, 1
    %2173 = vsyncpa [#allocation8], 1
    %2174 = vsyncpa [#allocation6], 1
    %s2175 = scalar_lea.sflag [#allocation6], 1
    %2176 = vsyncpa %s2175, 1

</llo_original>
